<compile_context>
chip_gen: v7x
topology: tpu7x:2x2x1
jax: 0.10.0
libtpu: 0.0.40
codegen_flags: <defaults>
</compile_context>

<pallas_src>
import functools

import jax
import jax.numpy as jnp
from jax import lax
from jax.experimental import pallas as pl
from jax.experimental.pallas import tpu as pltpu


def _attention_kernel(x_ref, wqkv_ref, wp_ref, bp_ref, o_ref, qkv_ref, ctx_ref,
                      *, num_heads, seq_len):
    """One grid step: `Bt = rows // seq_len` batch elements, full channels.

    x_ref   : (rows, C)   activations (compute dtype), rows = Bt * seq_len
    wqkv_ref: (C, 3C)     QKV weight, Q columns pre-scaled by head_dim**-0.5
    wp_ref  : (C, C)      output-projection weight (input-major)
    bp_ref  : (1, C)      output-projection bias (f32)
    o_ref   : (rows, C)   output
    qkv_ref : (rows, 3C)  VMEM scratch: staged QKV slab
    ctx_ref : (rows, C)   VMEM scratch: concatenated per-head contexts
    """
    rows, C = x_ref.shape
    Bt = rows // seq_len
    hd = C // num_heads
    dt = x_ref.dtype  # MXU operand dtype (bf16 fast path when params prepared in bf16)

    # ---- QKV projection: single slab matmul (M = rows, K = C), staged to VMEM scratch
    # so the big result is not kept live as an SSA value across the attention loop.
    qkv_ref[...] = jnp.dot(x_ref[...], wqkv_ref[...],
                           preferred_element_type=jnp.float32).astype(dt)

    def per_batch(b, carry):
        r0 = b * seq_len
        if seq_len % 128 == 0:
            r0 = pl.multiple_of(r0, 128)
        elif seq_len % 8 == 0:
            r0 = pl.multiple_of(r0, 8)

        # Head loop statically unrolled (num_heads is small); contexts are gathered
        # and written as one lane-dense full-C slab per batch element.
        ctx_heads = []
        for h in range(num_heads):
            q = qkv_ref[pl.ds(r0, seq_len), h * hd:(h + 1) * hd]                    # (N, hd)
            k = qkv_ref[pl.ds(r0, seq_len), C + h * hd:C + (h + 1) * hd]            # (N, hd)
            v = qkv_ref[pl.ds(r0, seq_len), 2 * C + h * hd:2 * C + (h + 1) * hd]    # (N, hd)

            # q @ k^T, contracting over head_dim (no materialized k.T in source).
            # TODO(synk): check lowered MLIR for an inserted per-head vxpose; if present,
            # stage K transposed (hd, N) in the qkv scratch instead.
            s = lax.dot_general(q, k, (((1,), (1,)), ((), ())),
                                preferred_element_type=jnp.float32)                 # (N, N) f32
            s = s - jnp.max(s, axis=-1, keepdims=True)
            p = jnp.exp(s)
            p = p * pl.reciprocal(jnp.sum(p, axis=-1, keepdims=True), approx=True)
            # attn_drop(p=0.0) -> identity (eval mode)

            oh = jnp.dot(p.astype(dt), v, preferred_element_type=jnp.float32)       # (N, hd)
            ctx_heads.append(oh.astype(dt))

        ctx_ref[pl.ds(r0, seq_len), :] = jnp.concatenate(ctx_heads, axis=-1)        # (N, C)
        return carry

    # Batch-in-block loop as fori_loop: bounds live ranges / compile time (no Python unroll).
    lax.fori_loop(0, Bt, per_batch, 0)

    # ---- Output projection: ONE (rows, C) @ (C, C) matmul + bias.
    y = jnp.dot(ctx_ref[...], wp_ref[...], preferred_element_type=jnp.float32)
    # proj_drop(p=0.0) -> identity (eval mode)
    o_ref[...] = (y + bp_ref[...]).astype(o_ref.dtype)


def _device_tuning():
    """Per-generation block / VMEM budgets."""
    kind = ""
    try:
        kind = jax.devices()[0].device_kind.lower()
    except Exception:
        pass
    if "v7" in kind or "7x" in kind:
        # 2 TensorCores, 64 MiB VMEM: keep >= 2 parallel grid steps, tight budget.
        return {"max_rows": 1024, "min_steps": 2, "vmem_cap": 56 << 20}
    if "v6" in kind or "v5e" in kind or "v5 lite" in kind or "v5lite" in kind:
        # Single TensorCore, 128 MiB VMEM: taller slabs, single grid step is fine.
        return {"max_rows": 2048, "min_steps": 1, "vmem_cap": 100 << 20}
    # Unknown generation -> conservative (v7x-safe) defaults.
    return {"max_rows": 1024, "min_steps": 2, "vmem_cap": 56 << 20}


def _pick_block_b(B, N, *, max_rows, min_steps, sublane=8):
    """Largest divisor of B such that the row slab fits `max_rows`, strict sub-blocks
    stay sublane-aligned, and (when possible) the grid keeps `min_steps` steps."""
    best = 1
    for cand in range(1, B + 1):
        if B % cand:
            continue
        if cand * N > max_rows:
            break
        if cand < B and (cand * N) % sublane != 0:
            continue              # avoid misaligned sub-block sublane dim (relayouts)
        if B // cand < min_steps and cand != 1:
            continue
        best = cand
    return best


def prepare_attention_params(w_qkv, w_proj, b_proj, *, dim, num_heads,
                             qk_scale=None, param_dtype=None):
    """One-time (model-init) parameter prep, hoisted out of the per-call path:
    fold the softmax scale into the Q columns of the QKV weight and optionally
    cast weights to a narrow MXU dtype (bf16 recommended at real MixSTE sizes)."""
    hd = dim // num_heads
    scale = qk_scale if qk_scale is not None else hd ** (-0.5)
    w_qkv_scaled = w_qkv.at[:, :dim].multiply(scale)
    if param_dtype is not None:
        w_qkv_scaled = w_qkv_scaled.astype(param_dtype)
        w_proj = w_proj.astype(param_dtype)
    b_proj_row = b_proj.reshape(1, dim).astype(jnp.float32)
    return w_qkv_scaled, w_proj, b_proj_row


def attention_pallas(x, w_qkv_scaled, w_proj, b_proj_row, *, num_heads, block_b=None):
    """x: (B, N, C); params as returned by prepare_attention_params."""
    B, N, C = x.shape
    out_dtype = x.dtype
    compute_dtype = w_qkv_scaled.dtype   # bf16 fast path when params prepared in bf16
    itm = jnp.dtype(compute_dtype).itemsize
    sublane = {4: 8, 2: 16, 1: 32}.get(itm, 8)

    tune = _device_tuning()
    if block_b is None:
        block_b = _pick_block_b(B, N, max_rows=tune["max_rows"],
                                min_steps=tune["min_steps"], sublane=sublane)
    assert B % block_b == 0, "block_b must divide B"

    rows_blk = block_b * N
    total_rows = B * N

    # Reshape at the XLA boundary (free) so the kernel never splits/merges a
    # non-multiple-of-8 sublane dim in VMEM.
    x2d = x.reshape(total_rows, C).astype(compute_dtype)

    # Explicit VMEM budget (v5e default scoped limit is only 16 MiB; v7x physical is 64 MiB).
    footprint = (
        2 * rows_blk * C * itm                                   # x block (double buffered)
        + 2 * rows_blk * C * jnp.dtype(out_dtype).itemsize       # out block (double buffered)
        + 2 * (3 * C * C + C * C) * itm + 2 * 4 * C              # weights + bias (double buffered)
        + rows_blk * 3 * C * itm + rows_blk * C * itm)           # qkv + ctx scratch
    vmem_limit = int(min(max(2 * footprint, 32 << 20), tune["vmem_cap"]))

    kernel = functools.partial(_attention_kernel, num_heads=num_heads, seq_len=N)

    # TODO(synk): at large C on v7x, mark the weight/bias BlockSpecs single-buffered
    # (pipeline_mode=pl.Buffered(1)) -- their index_map is constant across the grid.
    out2d = pl.pallas_call(
        kernel,
        out_shape=jax.ShapeDtypeStruct((total_rows, C), out_dtype),
        grid_spec=pltpu.PrefetchScalarGridSpec(
            num_scalar_prefetch=0,
            grid=(B // block_b,),
            in_specs=[
                pl.BlockSpec((rows_blk, C), lambda i: (i, 0)),
                pl.BlockSpec((C, 3 * C), lambda i: (0, 0)),
                pl.BlockSpec((C, C), lambda i: (0, 0)),
                pl.BlockSpec((1, C), lambda i: (0, 0)),
            ],
            out_specs=pl.BlockSpec((rows_blk, C), lambda i: (i, 0)),
            scratch_shapes=[
                pltpu.VMEM((rows_blk, 3 * C), compute_dtype),   # staged QKV slab
                pltpu.VMEM((rows_blk, C), compute_dtype),       # per-head contexts
            ],
        ),
        compiler_params=pltpu.CompilerParams(
            dimension_semantics=("parallel",),
            vmem_limit_bytes=vmem_limit,
        ),
    )(x2d, w_qkv_scaled, w_proj, b_proj_row)

    return out2d.reshape(B, N, C)


def attention_ref(x, w_qkv, w_proj, b_proj, *, num_heads):
    """Pure-JAX reference mirroring the PyTorch forward."""
    B, N, C = x.shape
    hd = C // num_heads
    scale = hd ** (-0.5)
    qkv = x @ w_qkv                                        # (B, N, 3C)
    qkv = qkv.reshape(B, N, 3, num_heads, hd).transpose(2, 0, 3, 1, 4)
    q, k, v = qkv[0], qkv[1], qkv[2]                       # (B, H, N, hd)
    attn = jnp.einsum("bhnd,bhmd->bhnm", q, k) * scale
    attn = jax.nn.softmax(attn, axis=-1)
    out = jnp.einsum("bhnm,bhmd->bhnd", attn, v)           # (B, H, N, hd)
    out = out.transpose(0, 2, 1, 3).reshape(B, N, C)
    return out @ w_proj + b_proj


if __name__ == "__main__":
    # Small shapes consistent with the module: B=2, N=16 tokens, C=32 dim, 8 heads.
    B, N, C = 2, 16, 32
    num_heads = 8

    key = jax.random.PRNGKey(0)
    kx, kqkv, kp, kb = jax.random.split(key, 4)

    x = jax.random.normal(kx, (B, N, C), dtype=jnp.float32)
    # Deterministic synthetic parameters (qkv_bias=False as in the default module).
    w_qkv = jax.random.normal(kqkv, (C, 3 * C), dtype=jnp.float32) * (C ** -0.5)
    w_proj = jax.random.normal(kp, (C, C), dtype=jnp.float32) * (C ** -0.5)
    b_proj = jax.random.normal(kb, (C,), dtype=jnp.float32) * 0.02

    ref = attention_ref(x, w_qkv, w_proj, b_proj, num_heads=num_heads)

    # f32 path: matches the nn.Module numerics (approx softmax reciprocal only).
    p32 = prepare_attention_params(w_qkv, w_proj, b_proj, dim=C, num_heads=num_heads)
    out32 = jax.block_until_ready(attention_pallas(x, *p32, num_heads=num_heads))
    assert out32.shape == (B, N, C)
    err32 = float(jnp.max(jnp.abs(out32 - ref)))
    assert err32 < 1e-2, f"f32 path mismatch vs reference, max abs err = {err32}"

    # bf16-weight MXU fast path (production config; params cast once at init).
    p16 = prepare_attention_params(w_qkv, w_proj, b_proj, dim=C, num_heads=num_heads,
                                   param_dtype=jnp.bfloat16)
    out16 = jax.block_until_ready(attention_pallas(x, *p16, num_heads=num_heads))
    err16 = float(jnp.max(jnp.abs(out16.astype(jnp.float32) - ref)))
    assert bool(jnp.all(jnp.isfinite(out16))) and err16 < 0.25, \
        f"bf16 path mismatch vs reference, max abs err = {err16}"

    print("KERNEL_OK")
</pallas_src>

<mosaic_0001>
module attributes {stable_mosaic.version = 11 : i64} {
  func.func @_attention_kernel(%arg0: i32, %arg1: memref<16x32xf32, #tpu.memory_space<vmem>>, %arg2: memref<32x96xf32, #tpu.memory_space<vmem>>, %arg3: memref<32x32xf32, #tpu.memory_space<vmem>>, %arg4: memref<1x32xf32, #tpu.memory_space<vmem>>, %arg5: memref<16x32xf32, #tpu.memory_space<vmem>>, %arg6: memref<16x96xf32, #tpu.memory_space<vmem>>, %arg7: memref<16x32xf32, #tpu.memory_space<vmem>>) attributes {dimension_semantics = [#tpu.dimension_semantics<parallel>], iteration_bounds = array<i64: 2>, scalar_prefetch = 0 : i64, scratch_operands = 2 : i64, tpu.core_type = #tpu.core_type<tc>, window_params = [{transform_indices = @transform_0, window_bounds = array<i64: 16, 32>}, {pipeline_mode = #tpu.pipeline_mode<synchronous>, transform_indices = @transform_1, window_bounds = array<i64: 32, 96>}, {pipeline_mode = #tpu.pipeline_mode<synchronous>, transform_indices = @transform_2, window_bounds = array<i64: 32, 32>}, {pipeline_mode = #tpu.pipeline_mode<synchronous>, transform_indices = @transform_3, window_bounds = array<i64: 1, 32>}, {transform_indices = @transform_4, window_bounds = array<i64: 16, 32>}]} {
    %c0 = arith.constant 0 : index
    %c0_0 = arith.constant 0 : index
    %0 = vector.load %arg1[%c0, %c0_0] : memref<16x32xf32, #tpu.memory_space<vmem>>, vector<16x32xf32>
    %c0_1 = arith.constant 0 : index
    %c0_2 = arith.constant 0 : index
    %1 = vector.load %arg2[%c0_1, %c0_2] : memref<32x96xf32, #tpu.memory_space<vmem>>, vector<32x96xf32>
    %cst = arith.constant dense<0.000000e+00> : vector<16x96xf32>
    %2 = tpu.matmul %0, %1, %cst {dimension_numbers = #tpu.dot_dimension_numbers<[1], [0], [0], [1], [0, 0, 1, 1], [], []>} : vector<16x32xf32>, vector<32x96xf32>, vector<16x96xf32> -> vector<16x96xf32>
    %c0_3 = arith.constant 0 : index
    %c0_4 = arith.constant 0 : index
    %3 = vector.load %arg6[%c0_3, %c0_4] : memref<16x96xf32, #tpu.memory_space<vmem>>, vector<16x96xf32>
    tpu.vector_store %arg6[%c0_3, %c0_4], %2 {strides = array<i32>} : memref<16x96xf32, #tpu.memory_space<vmem>>, vector<16x96xf32>,
    %c0_i32 = arith.constant 0 : i32
    %c16_i32 = arith.constant 16 : i32
    %4 = arith.muli %c0_i32, %c16_i32 : i32
    %5 = tpu.assume_multiple %4, 8 : i32
    %6 = arith.index_cast %5 : i32 to index
    %c0_5 = arith.constant 0 : index
    %7 = vector.load %arg6[%6, %c0_5] : memref<16x96xf32, #tpu.memory_space<vmem>>, vector<16x4xf32>
    %8 = arith.index_cast %5 : i32 to index
    %c32 = arith.constant 32 : index
    %9 = vector.load %arg6[%8, %c32] : memref<16x96xf32, #tpu.memory_space<vmem>>, vector<16x4xf32>
    %10 = arith.index_cast %5 : i32 to index
    %c64 = arith.constant 64 : index
    %11 = vector.load %arg6[%10, %c64] : memref<16x96xf32, #tpu.memory_space<vmem>>, vector<16x4xf32>
    %cst_6 = arith.constant dense<0.000000e+00> : vector<16x16xf32>
    %12 = tpu.matmul %7, %9, %cst_6 {dimension_numbers = #tpu.dot_dimension_numbers<[1], [1], [0], [0], [0, 0, 1, 0], [], []>} : vector<16x4xf32>, vector<16x4xf32>, vector<16x16xf32> -> vector<16x16xf32>
    %cst_7 = arith.constant dense<0xFF800000> : vector<16xf32>
    %13 = vector.multi_reduction <maximumf>, %12, %cst_7 [1] : vector<16x16xf32> to vector<16xf32>
    %14 = vector.shape_cast %13 : vector<16xf32> to vector<16x1xf32>
    %15 = vector.broadcast %14 : vector<16x1xf32> to vector<16x16xf32>
    %16 = arith.subf %12, %15 : vector<16x16xf32>
    %17 = math.exp %16 : vector<16x16xf32>
    %cst_8 = arith.constant dense<0.000000e+00> : vector<16xf32>
    %18 = vector.multi_reduction <add>, %17, %cst_8 [1] : vector<16x16xf32> to vector<16xf32>
    %19 = vector.shape_cast %18 : vector<16xf32> to vector<16x1xf32>
    %20 = tpu.reciprocal %19 {approx = true} : vector<16x1xf32> -> vector<16x1xf32>
    %21 = vector.broadcast %20 : vector<16x1xf32> to vector<16x16xf32>
    %22 = arith.mulf %17, %21 : vector<16x16xf32>
    %cst_9 = arith.constant dense<0.000000e+00> : vector<16x4xf32>
    %23 = tpu.matmul %22, %11, %cst_9 {dimension_numbers = #tpu.dot_dimension_numbers<[1], [0], [0], [1], [0, 0, 1, 1], [], []>} : vector<16x16xf32>, vector<16x4xf32>, vector<16x4xf32> -> vector<16x4xf32>
    %24 = arith.index_cast %5 : i32 to index
    %c4 = arith.constant 4 : index
    %25 = vector.load %arg6[%24, %c4] : memref<16x96xf32, #tpu.memory_space<vmem>>, vector<16x4xf32>
    %26 = arith.index_cast %5 : i32 to index
    %c36 = arith.constant 36 : index
    %27 = vector.load %arg6[%26, %c36] : memref<16x96xf32, #tpu.memory_space<vmem>>, vector<16x4xf32>
    %28 = arith.index_cast %5 : i32 to index
    %c68 = arith.constant 68 : index
    %29 = vector.load %arg6[%28, %c68] : memref<16x96xf32, #tpu.memory_space<vmem>>, vector<16x4xf32>
    %cst_10 = arith.constant dense<0.000000e+00> : vector<16x16xf32>
    %30 = tpu.matmul %25, %27, %cst_10 {dimension_numbers = #tpu.dot_dimension_numbers<[1], [1], [0], [0], [0, 0, 1, 0], [], []>} : vector<16x4xf32>, vector<16x4xf32>, vector<16x16xf32> -> vector<16x16xf32>
    %cst_11 = arith.constant dense<0xFF800000> : vector<16xf32>
    %31 = vector.multi_reduction <maximumf>, %30, %cst_11 [1] : vector<16x16xf32> to vector<16xf32>
    %32 = vector.shape_cast %31 : vector<16xf32> to vector<16x1xf32>
    %33 = vector.broadcast %32 : vector<16x1xf32> to vector<16x16xf32>
    %34 = arith.subf %30, %33 : vector<16x16xf32>
    %35 = math.exp %34 : vector<16x16xf32>
    %cst_12 = arith.constant dense<0.000000e+00> : vector<16xf32>
    %36 = vector.multi_reduction <add>, %35, %cst_12 [1] : vector<16x16xf32> to vector<16xf32>
    %37 = vector.shape_cast %36 : vector<16xf32> to vector<16x1xf32>
    %38 = tpu.reciprocal %37 {approx = true} : vector<16x1xf32> -> vector<16x1xf32>
    %39 = vector.broadcast %38 : vector<16x1xf32> to vector<16x16xf32>
    %40 = arith.mulf %35, %39 : vector<16x16xf32>
    %cst_13 = arith.constant dense<0.000000e+00> : vector<16x4xf32>
    %41 = tpu.matmul %40, %29, %cst_13 {dimension_numbers = #tpu.dot_dimension_numbers<[1], [0], [0], [1], [0, 0, 1, 1], [], []>} : vector<16x16xf32>, vector<16x4xf32>, vector<16x4xf32> -> vector<16x4xf32>
    %42 = arith.index_cast %5 : i32 to index
    %c8 = arith.constant 8 : index
    %43 = vector.load %arg6[%42, %c8] : memref<16x96xf32, #tpu.memory_space<vmem>>, vector<16x4xf32>
    %44 = arith.index_cast %5 : i32 to index
    %c40 = arith.constant 40 : index
    %45 = vector.load %arg6[%44, %c40] : memref<16x96xf32, #tpu.memory_space<vmem>>, vector<16x4xf32>
    %46 = arith.index_cast %5 : i32 to index
    %c72 = arith.constant 72 : index
    %47 = vector.load %arg6[%46, %c72] : memref<16x96xf32, #tpu.memory_space<vmem>>, vector<16x4xf32>
    %cst_14 = arith.constant dense<0.000000e+00> : vector<16x16xf32>
    %48 = tpu.matmul %43, %45, %cst_14 {dimension_numbers = #tpu.dot_dimension_numbers<[1], [1], [0], [0], [0, 0, 1, 0], [], []>} : vector<16x4xf32>, vector<16x4xf32>, vector<16x16xf32> -> vector<16x16xf32>
    %cst_15 = arith.constant dense<0xFF800000> : vector<16xf32>
    %49 = vector.multi_reduction <maximumf>, %48, %cst_15 [1] : vector<16x16xf32> to vector<16xf32>
    %50 = vector.shape_cast %49 : vector<16xf32> to vector<16x1xf32>
    %51 = vector.broadcast %50 : vector<16x1xf32> to vector<16x16xf32>
    %52 = arith.subf %48, %51 : vector<16x16xf32>
    %53 = math.exp %52 : vector<16x16xf32>
    %cst_16 = arith.constant dense<0.000000e+00> : vector<16xf32>
    %54 = vector.multi_reduction <add>, %53, %cst_16 [1] : vector<16x16xf32> to vector<16xf32>
    %55 = vector.shape_cast %54 : vector<16xf32> to vector<16x1xf32>
    %56 = tpu.reciprocal %55 {approx = true} : vector<16x1xf32> -> vector<16x1xf32>
    %57 = vector.broadcast %56 : vector<16x1xf32> to vector<16x16xf32>
    %58 = arith.mulf %53, %57 : vector<16x16xf32>
    %cst_17 = arith.constant dense<0.000000e+00> : vector<16x4xf32>
    %59 = tpu.matmul %58, %47, %cst_17 {dimension_numbers = #tpu.dot_dimension_numbers<[1], [0], [0], [1], [0, 0, 1, 1], [], []>} : vector<16x16xf32>, vector<16x4xf32>, vector<16x4xf32> -> vector<16x4xf32>
    %60 = arith.index_cast %5 : i32 to index
    %c12 = arith.constant 12 : index
    %61 = vector.load %arg6[%60, %c12] : memref<16x96xf32, #tpu.memory_space<vmem>>, vector<16x4xf32>
    %62 = arith.index_cast %5 : i32 to index
    %c44 = arith.constant 44 : index
    %63 = vector.load %arg6[%62, %c44] : memref<16x96xf32, #tpu.memory_space<vmem>>, vector<16x4xf32>
    %64 = arith.index_cast %5 : i32 to index
    %c76 = arith.constant 76 : index
    %65 = vector.load %arg6[%64, %c76] : memref<16x96xf32, #tpu.memory_space<vmem>>, vector<16x4xf32>
    %cst_18 = arith.constant dense<0.000000e+00> : vector<16x16xf32>
    %66 = tpu.matmul %61, %63, %cst_18 {dimension_numbers = #tpu.dot_dimension_numbers<[1], [1], [0], [0], [0, 0, 1, 0], [], []>} : vector<16x4xf32>, vector<16x4xf32>, vector<16x16xf32> -> vector<16x16xf32>
    %cst_19 = arith.constant dense<0xFF800000> : vector<16xf32>
    %67 = vector.multi_reduction <maximumf>, %66, %cst_19 [1] : vector<16x16xf32> to vector<16xf32>
    %68 = vector.shape_cast %67 : vector<16xf32> to vector<16x1xf32>
    %69 = vector.broadcast %68 : vector<16x1xf32> to vector<16x16xf32>
    %70 = arith.subf %66, %69 : vector<16x16xf32>
    %71 = math.exp %70 : vector<16x16xf32>
    %cst_20 = arith.constant dense<0.000000e+00> : vector<16xf32>
    %72 = vector.multi_reduction <add>, %71, %cst_20 [1] : vector<16x16xf32> to vector<16xf32>
    %73 = vector.shape_cast %72 : vector<16xf32> to vector<16x1xf32>
    %74 = tpu.reciprocal %73 {approx = true} : vector<16x1xf32> -> vector<16x1xf32>
    %75 = vector.broadcast %74 : vector<16x1xf32> to vector<16x16xf32>
    %76 = arith.mulf %71, %75 : vector<16x16xf32>
    %cst_21 = arith.constant dense<0.000000e+00> : vector<16x4xf32>
    %77 = tpu.matmul %76, %65, %cst_21 {dimension_numbers = #tpu.dot_dimension_numbers<[1], [0], [0], [1], [0, 0, 1, 1], [], []>} : vector<16x16xf32>, vector<16x4xf32>, vector<16x4xf32> -> vector<16x4xf32>
    %78 = arith.index_cast %5 : i32 to index
    %c16 = arith.constant 16 : index
    %79 = vector.load %arg6[%78, %c16] : memref<16x96xf32, #tpu.memory_space<vmem>>, vector<16x4xf32>
    %80 = arith.index_cast %5 : i32 to index
    %c48 = arith.constant 48 : index
    %81 = vector.load %arg6[%80, %c48] : memref<16x96xf32, #tpu.memory_space<vmem>>, vector<16x4xf32>
    %82 = arith.index_cast %5 : i32 to index
    %c80 = arith.constant 80 : index
    %83 = vector.load %arg6[%82, %c80] : memref<16x96xf32, #tpu.memory_space<vmem>>, vector<16x4xf32>
    %cst_22 = arith.constant dense<0.000000e+00> : vector<16x16xf32>
    %84 = tpu.matmul %79, %81, %cst_22 {dimension_numbers = #tpu.dot_dimension_numbers<[1], [1], [0], [0], [0, 0, 1, 0], [], []>} : vector<16x4xf32>, vector<16x4xf32>, vector<16x16xf32> -> vector<16x16xf32>
    %cst_23 = arith.constant dense<0xFF800000> : vector<16xf32>
    %85 = vector.multi_reduction <maximumf>, %84, %cst_23 [1] : vector<16x16xf32> to vector<16xf32>
    %86 = vector.shape_cast %85 : vector<16xf32> to vector<16x1xf32>
    %87 = vector.broadcast %86 : vector<16x1xf32> to vector<16x16xf32>
    %88 = arith.subf %84, %87 : vector<16x16xf32>
    %89 = math.exp %88 : vector<16x16xf32>
    %cst_24 = arith.constant dense<0.000000e+00> : vector<16xf32>
    %90 = vector.multi_reduction <add>, %89, %cst_24 [1] : vector<16x16xf32> to vector<16xf32>
    %91 = vector.shape_cast %90 : vector<16xf32> to vector<16x1xf32>
    %92 = tpu.reciprocal %91 {approx = true} : vector<16x1xf32> -> vector<16x1xf32>
    %93 = vector.broadcast %92 : vector<16x1xf32> to vector<16x16xf32>
    %94 = arith.mulf %89, %93 : vector<16x16xf32>
    %cst_25 = arith.constant dense<0.000000e+00> : vector<16x4xf32>
    %95 = tpu.matmul %94, %83, %cst_25 {dimension_numbers = #tpu.dot_dimension_numbers<[1], [0], [0], [1], [0, 0, 1, 1], [], []>} : vector<16x16xf32>, vector<16x4xf32>, vector<16x4xf32> -> vector<16x4xf32>
    %96 = arith.index_cast %5 : i32 to index
    %c20 = arith.constant 20 : index
    %97 = vector.load %arg6[%96, %c20] : memref<16x96xf32, #tpu.memory_space<vmem>>, vector<16x4xf32>
    %98 = arith.index_cast %5 : i32 to index
    %c52 = arith.constant 52 : index
    %99 = vector.load %arg6[%98, %c52] : memref<16x96xf32, #tpu.memory_space<vmem>>, vector<16x4xf32>
    %100 = arith.index_cast %5 : i32 to index
    %c84 = arith.constant 84 : index
    %101 = vector.load %arg6[%100, %c84] : memref<16x96xf32, #tpu.memory_space<vmem>>, vector<16x4xf32>
    %cst_26 = arith.constant dense<0.000000e+00> : vector<16x16xf32>
    %102 = tpu.matmul %97, %99, %cst_26 {dimension_numbers = #tpu.dot_dimension_numbers<[1], [1], [0], [0], [0, 0, 1, 0], [], []>} : vector<16x4xf32>, vector<16x4xf32>, vector<16x16xf32> -> vector<16x16xf32>
    %cst_27 = arith.constant dense<0xFF800000> : vector<16xf32>
    %103 = vector.multi_reduction <maximumf>, %102, %cst_27 [1] : vector<16x16xf32> to vector<16xf32>
    %104 = vector.shape_cast %103 : vector<16xf32> to vector<16x1xf32>
    %105 = vector.broadcast %104 : vector<16x1xf32> to vector<16x16xf32>
    %106 = arith.subf %102, %105 : vector<16x16xf32>
    %107 = math.exp %106 : vector<16x16xf32>
    %cst_28 = arith.constant dense<0.000000e+00> : vector<16xf32>
    %108 = vector.multi_reduction <add>, %107, %cst_28 [1] : vector<16x16xf32> to vector<16xf32>
    %109 = vector.shape_cast %108 : vector<16xf32> to vector<16x1xf32>
    %110 = tpu.reciprocal %109 {approx = true} : vector<16x1xf32> -> vector<16x1xf32>
    %111 = vector.broadcast %110 : vector<16x1xf32> to vector<16x16xf32>
    %112 = arith.mulf %107, %111 : vector<16x16xf32>
    %cst_29 = arith.constant dense<0.000000e+00> : vector<16x4xf32>
    %113 = tpu.matmul %112, %101, %cst_29 {dimension_numbers = #tpu.dot_dimension_numbers<[1], [0], [0], [1], [0, 0, 1, 1], [], []>} : vector<16x16xf32>, vector<16x4xf32>, vector<16x4xf32> -> vector<16x4xf32>
    %114 = arith.index_cast %5 : i32 to index
    %c24 = arith.constant 24 : index
    %115 = vector.load %arg6[%114, %c24] : memref<16x96xf32, #tpu.memory_space<vmem>>, vector<16x4xf32>
    %116 = arith.index_cast %5 : i32 to index
    %c56 = arith.constant 56 : index
    %117 = vector.load %arg6[%116, %c56] : memref<16x96xf32, #tpu.memory_space<vmem>>, vector<16x4xf32>
    %118 = arith.index_cast %5 : i32 to index
    %c88 = arith.constant 88 : index
    %119 = vector.load %arg6[%118, %c88] : memref<16x96xf32, #tpu.memory_space<vmem>>, vector<16x4xf32>
    %cst_30 = arith.constant dense<0.000000e+00> : vector<16x16xf32>
    %120 = tpu.matmul %115, %117, %cst_30 {dimension_numbers = #tpu.dot_dimension_numbers<[1], [1], [0], [0], [0, 0, 1, 0], [], []>} : vector<16x4xf32>, vector<16x4xf32>, vector<16x16xf32> -> vector<16x16xf32>
    %cst_31 = arith.constant dense<0xFF800000> : vector<16xf32>
    %121 = vector.multi_reduction <maximumf>, %120, %cst_31 [1] : vector<16x16xf32> to vector<16xf32>
    %122 = vector.shape_cast %121 : vector<16xf32> to vector<16x1xf32>
    %123 = vector.broadcast %122 : vector<16x1xf32> to vector<16x16xf32>
    %124 = arith.subf %120, %123 : vector<16x16xf32>
    %125 = math.exp %124 : vector<16x16xf32>
    %cst_32 = arith.constant dense<0.000000e+00> : vector<16xf32>
    %126 = vector.multi_reduction <add>, %125, %cst_32 [1] : vector<16x16xf32> to vector<16xf32>
    %127 = vector.shape_cast %126 : vector<16xf32> to vector<16x1xf32>
    %128 = tpu.reciprocal %127 {approx = true} : vector<16x1xf32> -> vector<16x1xf32>
    %129 = vector.broadcast %128 : vector<16x1xf32> to vector<16x16xf32>
    %130 = arith.mulf %125, %129 : vector<16x16xf32>
    %cst_33 = arith.constant dense<0.000000e+00> : vector<16x4xf32>
    %131 = tpu.matmul %130, %119, %cst_33 {dimension_numbers = #tpu.dot_dimension_numbers<[1], [0], [0], [1], [0, 0, 1, 1], [], []>} : vector<16x16xf32>, vector<16x4xf32>, vector<16x4xf32> -> vector<16x4xf32>
    %132 = arith.index_cast %5 : i32 to index
    %c28 = arith.constant 28 : index
    %133 = vector.load %arg6[%132, %c28] : memref<16x96xf32, #tpu.memory_space<vmem>>, vector<16x4xf32>
    %134 = arith.index_cast %5 : i32 to index
    %c60 = arith.constant 60 : index
    %135 = vector.load %arg6[%134, %c60] : memref<16x96xf32, #tpu.memory_space<vmem>>, vector<16x4xf32>
    %136 = arith.index_cast %5 : i32 to index
    %c92 = arith.constant 92 : index
    %137 = vector.load %arg6[%136, %c92] : memref<16x96xf32, #tpu.memory_space<vmem>>, vector<16x4xf32>
    %cst_34 = arith.constant dense<0.000000e+00> : vector<16x16xf32>
    %138 = tpu.matmul %133, %135, %cst_34 {dimension_numbers = #tpu.dot_dimension_numbers<[1], [1], [0], [0], [0, 0, 1, 0], [], []>} : vector<16x4xf32>, vector<16x4xf32>, vector<16x16xf32> -> vector<16x16xf32>
    %cst_35 = arith.constant dense<0xFF800000> : vector<16xf32>
    %139 = vector.multi_reduction <maximumf>, %138, %cst_35 [1] : vector<16x16xf32> to vector<16xf32>
    %140 = vector.shape_cast %139 : vector<16xf32> to vector<16x1xf32>
    %141 = vector.broadcast %140 : vector<16x1xf32> to vector<16x16xf32>
    %142 = arith.subf %138, %141 : vector<16x16xf32>
    %143 = math.exp %142 : vector<16x16xf32>
    %cst_36 = arith.constant dense<0.000000e+00> : vector<16xf32>
    %144 = vector.multi_reduction <add>, %143, %cst_36 [1] : vector<16x16xf32> to vector<16xf32>
    %145 = vector.shape_cast %144 : vector<16xf32> to vector<16x1xf32>
    %146 = tpu.reciprocal %145 {approx = true} : vector<16x1xf32> -> vector<16x1xf32>
    %147 = vector.broadcast %146 : vector<16x1xf32> to vector<16x16xf32>
    %148 = arith.mulf %143, %147 : vector<16x16xf32>
    %cst_37 = arith.constant dense<0.000000e+00> : vector<16x4xf32>
    %149 = tpu.matmul %148, %137, %cst_37 {dimension_numbers = #tpu.dot_dimension_numbers<[1], [0], [0], [1], [0, 0, 1, 1], [], []>} : vector<16x16xf32>, vector<16x4xf32>, vector<16x4xf32> -> vector<16x4xf32>
    %150 = tpu.concatenate %23, %41, %59, %77, %95, %113, %131, %149 in 1 : vector<16x4xf32>, vector<16x4xf32>, vector<16x4xf32>, vector<16x4xf32>, vector<16x4xf32>, vector<16x4xf32>, vector<16x4xf32>, vector<16x4xf32> -> vector<16x32xf32>
    %151 = arith.index_cast %5 : i32 to index
    %c0_38 = arith.constant 0 : index
    %152 = vector.load %arg7[%151, %c0_38] : memref<16x32xf32, #tpu.memory_space<vmem>>, vector<16x32xf32>
    tpu.vector_store %arg7[%151, %c0_38], %150 {strides = array<i32>} : memref<16x32xf32, #tpu.memory_space<vmem>>, vector<16x32xf32>,
    %c1_i32 = arith.constant 1 : i32
    %c0_39 = arith.constant 0 : index
    %c0_40 = arith.constant 0 : index
    %153 = vector.load %arg7[%c0_39, %c0_40] : memref<16x32xf32, #tpu.memory_space<vmem>>, vector<16x32xf32>
    %c0_41 = arith.constant 0 : index
    %c0_42 = arith.constant 0 : index
    %154 = vector.load %arg3[%c0_41, %c0_42] : memref<32x32xf32, #tpu.memory_space<vmem>>, vector<32x32xf32>
    %cst_43 = arith.constant dense<0.000000e+00> : vector<16x32xf32>
    %155 = tpu.matmul %153, %154, %cst_43 {dimension_numbers = #tpu.dot_dimension_numbers<[1], [0], [0], [1], [0, 0, 1, 1], [], []>} : vector<16x32xf32>, vector<32x32xf32>, vector<16x32xf32> -> vector<16x32xf32>
    %c0_44 = arith.constant 0 : index
    %c0_45 = arith.constant 0 : index
    %156 = vector.load %arg4[%c0_44, %c0_45] : memref<1x32xf32, #tpu.memory_space<vmem>>, vector<1x32xf32>
    %157 = vector.broadcast %156 : vector<1x32xf32> to vector<16x32xf32>
    %158 = arith.addf %155, %157 : vector<16x32xf32>
    %c0_46 = arith.constant 0 : index
    %c0_47 = arith.constant 0 : index
    %159 = vector.load %arg5[%c0_46, %c0_47] : memref<16x32xf32, #tpu.memory_space<vmem>>, vector<16x32xf32>
    tpu.vector_store %arg5[%c0_46, %c0_47], %158 {strides = array<i32>} : memref<16x32xf32, #tpu.memory_space<vmem>>, vector<16x32xf32>,
    return
  }
  func.func @transform_0(%arg0: i32) -> (i32, i32) {
    %c0_i32 = arith.constant 0 : i32
    %c0_i32_0 = arith.constant 0 : i32
    return %arg0, %c0_i32 : i32, i32
  }
  func.func @transform_1(%arg0: i32) -> (i32, i32) {
    %c0_i32 = arith.constant 0 : i32
    %c0_i32_0 = arith.constant 0 : i32
    %c0_i32_1 = arith.constant 0 : i32
    return %c0_i32, %c0_i32_0 : i32, i32
  }
  func.func @transform_2(%arg0: i32) -> (i32, i32) {
    %c0_i32 = arith.constant 0 : i32
    %c0_i32_0 = arith.constant 0 : i32
    %c0_i32_1 = arith.constant 0 : i32
    return %c0_i32, %c0_i32_0 : i32, i32
  }
  func.func @transform_3(%arg0: i32) -> (i32, i32) {
    %c0_i32 = arith.constant 0 : i32
    %c0_i32_0 = arith.constant 0 : i32
    %c0_i32_1 = arith.constant 0 : i32
    return %c0_i32, %c0_i32_0 : i32, i32
  }
  func.func @transform_4(%arg0: i32) -> (i32, i32) {
    %c0_i32 = arith.constant 0 : i32
    %c0_i32_0 = arith.constant 0 : i32
    return %arg0, %c0_i32 : i32, i32
  }
}

</mosaic_0001>

<llo_original>
// kernel: tpu_custom_call.1
$region0: #{tpu_custom_call.1}
  #allocation0 [shape = 'u32[]', space=smem, size = 0x4, offset = 0x4, fixed_abs, tag = 'smem constant byte address 0x4 - core index']
  #allocation1 [shape = 'u32[144,128]{1,0:T(1,128)}', space=vmem, size = 0x12000, scoped, tag = 'internal scratch']
  #allocation2 [shape = 'f32[16,96]{1,0:T(8,128)}', space=vmem, size = 0x2000, scoped, tag = 'scratch operand']
  #allocation3 [shape = 'f32[16,32]{1,0:T(8,128)}', space=vmem, size = 0x2000, scoped, tag = 'scratch operand']
  %s0 = inlined_call_operand.hbm [shape: f32[32,32], index: 0, kind: input, shape index: {}]
  %s1 = inlined_call_operand.hbm [shape: f32[32,96], index: 1, kind: input, shape index: {}]
  %s2 = inlined_call_operand.hbm [shape: f32[32,32], index: 2, kind: input, shape index: {}]
  %s3 = inlined_call_operand.vmem [shape: f32[1,32], index: 3, kind: input, shape index: {}]
  %s4 = inlined_call_operand.hbm [shape: f32[32,32], index: 4, kind: output, shape index: {}]
  %s5 = sld [smem:[#allocation0]]
  $region61: #{tpu_custom_call.1} parent=0
    _
  %s7 = ssub.s32 1, %s5
  %s8 = scalar_select 0, %s7, %s5
  $region1: #{tpu_custom_call.1} parent=0
    #allocation4 [shape = 'u8[16384]{0}', space=vmem, size = 0x4000, scoped, tag = 'input window, operand 0']
    #allocation5 [shape = 's32[2]{0}', space=sflag, size = 0x8, scoped, tag = 'scoped memory for tpu_custom_call.1']
    #allocation6 [shape = 's32[2]{0}', space=sflag, size = 0x8, scoped, tag = 'scoped memory for tpu_custom_call.1']
    #allocation7 [shape = 'u8[16384]{0}', space=vmem, size = 0x4000, scoped, tag = 'input window, operand 1, single buffered']
    #allocation8 [shape = 's32[1]{0}', space=sflag, size = 0x4, scoped, tag = 'scoped memory for tpu_custom_call.1']
    #allocation9 [shape = 'u8[16384]{0}', space=vmem, size = 0x4000, scoped, tag = 'input window, operand 2, single buffered']
    #allocation10 [shape = 'u8[16384]{0}', space=vmem, size = 0x4000, scoped, tag = 'output window, operand 0']
    %9 = vsyncpa [#allocation5], 0
    %s10 = scalar_lea.sflag [#allocation5], 1
    %11 = vsyncpa %s10, 0
    %12 = vsyncpa [#allocation8], 0
    %13 = vsyncpa [#allocation6], 0
    %s14 = scalar_lea.sflag [#allocation6], 1
    %15 = vsyncpa %s14, 0
    loop: start=0, step=1, limit=4
    $region2: #{tpu_custom_call.1} parent=1 // loop_pre_header
      _
    $region3: #{tpu_custom_call.1} parent=1 // loop_header
      %s17 = sphi 0, %s21
      %p18 = scmp.ge.s32.totalorder %s17, 4
      %s27 = sphi 0, %s29
      %s30 = sphi 0, %s27
      %s31 = sphi 0, %s30
      %s47 = sphi 0, %s31
      %s51 = sphi 0, %s51
      %s53 = sphi 0, %s51
      %s54 = sphi 0, %s53
      %s68 = sphi 0, %s54
      %s72 = sphi 0, %s72
      %s74 = sphi 0, %s72
      %s75 = sphi 0, %s74
      %s89 = sphi 0, %s75
      %s93 = sphi 0, %s93
      %s95 = sphi 0, %s93
      %s96 = sphi 0, %s95
      %s110 = sphi 0, %s96
      %s116 = sphi 0, %s118
      %s119 = sphi 0, %s116
      %s120 = sphi 0, %s119
      %s136 = sphi 0, %s120
    $region4: #{tpu_custom_call.1} parent=1 // loop_header_branch
      %20 = sbr.rel (%p18) target = $region8
    $region5: #{tpu_custom_call.1} parent=1 // loop_body
      %s22 = ssub.s32 %s17, 1
      %s23 = ssub.s32 %s17, 2
      %s24 = sadd.s32 %s17, 1
      %s25 = ssub.s32 %s17, %s24
      %p26 = scmp.eq.s32.totalorder %s25, 0
      %s28 = sadd.s32 %s27, 1
      %s29 = scalar_select %p26, %s27, %s28
      %p32 = pneg %p26
      %p33 = scmp.eq.s32.totalorder %s17, 1
      %p34 = por %p32, %p33
      %p35 = scmp.ne.s32.totalorder %s27, %s30
      %p36 = scmp.eq.s32.totalorder %s17, 0
      %p37 = por %p35, %p36
      %p38 = scmp.ne.s32.totalorder %s27, %s30
      %p39 = scmp.eq.s32.totalorder %s22, 1
      %p40 = por %p38, %p39
      %p41 = scmp.ne.s32.totalorder %s30, %s31
      %p42 = scmp.eq.s32.totalorder %s22, 0
      %p43 = por %p41, %p42
      %p44 = scmp.ne.s32.totalorder %s30, %s31
      %p45 = scmp.eq.s32.totalorder %s23, 1
      %p46 = por %p44, %p45
      %p48 = scmp.ne.s32.totalorder %s31, %s47
      %p49 = scmp.eq.s32.totalorder %s23, 0
      %p50 = por %p48, %p49
      %s52 = sadd.s32 %s51, 1
      %p55 = scmp.eq.s32.totalorder %s17, 1
      %p56 = scmp.ne.s32.totalorder %s51, %s53
      %p57 = scmp.eq.s32.totalorder %s17, 0
      %p58 = por %p56, %p57
      %p59 = scmp.ne.s32.totalorder %s51, %s53
      %p60 = scmp.eq.s32.totalorder %s22, 1
      %p61 = por %p59, %p60
      %p62 = scmp.ne.s32.totalorder %s53, %s54
      %p63 = scmp.eq.s32.totalorder %s22, 0
      %p64 = por %p62, %p63
      %p65 = scmp.ne.s32.totalorder %s53, %s54
      %p66 = scmp.eq.s32.totalorder %s23, 1
      %p67 = por %p65, %p66
      %p69 = scmp.ne.s32.totalorder %s54, %s68
      %p70 = scmp.eq.s32.totalorder %s23, 0
      %p71 = por %p69, %p70
      %s73 = sadd.s32 %s72, 1
      %p76 = scmp.eq.s32.totalorder %s17, 1
      %p77 = scmp.ne.s32.totalorder %s72, %s74
      %p78 = scmp.eq.s32.totalorder %s17, 0
      %p79 = por %p77, %p78
      %p80 = scmp.ne.s32.totalorder %s72, %s74
      %p81 = scmp.eq.s32.totalorder %s22, 1
      %p82 = por %p80, %p81
      %p83 = scmp.ne.s32.totalorder %s74, %s75
      %p84 = scmp.eq.s32.totalorder %s22, 0
      %p85 = por %p83, %p84
      %p86 = scmp.ne.s32.totalorder %s74, %s75
      %p87 = scmp.eq.s32.totalorder %s23, 1
      %p88 = por %p86, %p87
      %p90 = scmp.ne.s32.totalorder %s75, %s89
      %p91 = scmp.eq.s32.totalorder %s23, 0
      %p92 = por %p90, %p91
      %s94 = sadd.s32 %s93, 1
      %p97 = scmp.eq.s32.totalorder %s17, 1
      %p98 = scmp.ne.s32.totalorder %s93, %s95
      %p99 = scmp.eq.s32.totalorder %s17, 0
      %p100 = por %p98, %p99
      %p101 = scmp.ne.s32.totalorder %s93, %s95
      %p102 = scmp.eq.s32.totalorder %s22, 1
      %p103 = por %p101, %p102
      %p104 = scmp.ne.s32.totalorder %s95, %s96
      %p105 = scmp.eq.s32.totalorder %s22, 0
      %p106 = por %p104, %p105
      %p107 = scmp.ne.s32.totalorder %s95, %s96
      %p108 = scmp.eq.s32.totalorder %s23, 1
      %p109 = por %p107, %p108
      %p111 = scmp.ne.s32.totalorder %s96, %s110
      %p112 = scmp.eq.s32.totalorder %s23, 0
      %p113 = por %p111, %p112
      %s114 = ssub.s32 %s17, %s24
      %p115 = scmp.eq.s32.totalorder %s114, 0
      %s117 = sadd.s32 %s116, 1
      %s118 = scalar_select %p115, %s116, %s117
      %p121 = pneg %p115
      %p122 = scmp.eq.s32.totalorder %s17, 1
      %p123 = por %p121, %p122
      %p124 = scmp.ne.s32.totalorder %s116, %s119
      %p125 = scmp.eq.s32.totalorder %s17, 0
      %p126 = por %p124, %p125
      %p127 = scmp.ne.s32.totalorder %s116, %s119
      %p128 = scmp.eq.s32.totalorder %s22, 1
      %p129 = por %p127, %p128
      %p130 = scmp.ne.s32.totalorder %s119, %s120
      %p131 = scmp.eq.s32.totalorder %s22, 0
      %p132 = por %p130, %p131
      %p133 = scmp.ne.s32.totalorder %s119, %s120
      %p134 = scmp.eq.s32.totalorder %s23, 1
      %p135 = por %p133, %p134
      %p137 = scmp.ne.s32.totalorder %s120, %s136
      %p138 = scmp.eq.s32.totalorder %s23, 0
      %p139 = por %p137, %p138
      %p140 = scmp.le.s32.totalorder 1, %s17
      %p141 = scmp.lt.s32.totalorder %s17, 3
      %p142 = pnand %p140, %p141
      %p143 = pneg %p142
      // Predicated region
      $region9: #{tpu_custom_call.1} parent=5 // pred_check
        _
      $region10: #{tpu_custom_call.1} parent=5 // pred_check_branch
        %145 = sbr.rel (%p142) target = $region12
      $region11: #{tpu_custom_call.1} parent=5 // pred_region
        %s146 = ssub.s32 %s17, 1
        // Predicated region
        $region13: #{tpu_custom_call.1} parent=11 // pred_check
          %p147 = pneg %p64
        $region14: #{tpu_custom_call.1} parent=11 // pred_check_branch
          %149 = sbr.rel (%p147) target = $region16
        $region15: #{tpu_custom_call.1} parent=11 // pred_region
          %s151 = ssub.s32 512, 512
          %152 = vsyncadd [#allocation8], %s151
          %s153 = sshll.u32 [#allocation7], 4
          %s154 = int_to_ptr.vmem [resolvable:$true] %s153
          %159 = dma.hbm_to_vmem [thread:$0]  %s1, 512, %s154, [#allocation8], 128, 128, 8
        $region16: #{tpu_custom_call.1} parent=11 // pred_fallthru
          _
        // Predicated region
        $region17: #{tpu_custom_call.1} parent=11 // pred_check
          %p160 = pneg %p85
        $region18: #{tpu_custom_call.1} parent=11 // pred_check_branch
          %162 = sbr.rel (%p160) target = $region20
        $region19: #{tpu_custom_call.1} parent=11 // pred_region
          %s164 = ssub.s32 512, 512
          %165 = vsyncadd [#allocation8], %s164
          %s166 = sshll.u32 [#allocation9], 4
          %s167 = int_to_ptr.vmem [resolvable:$true] %s166
          %172 = dma.hbm_to_vmem [thread:$0]  %s2, 512, %s167, [#allocation8], 128, 128, 8
        $region20: #{tpu_custom_call.1} parent=11 // pred_fallthru
          _
        // Predicated region
        $region21: #{tpu_custom_call.1} parent=11 // pred_check
          %p173 = pneg %p106
        $region22: #{tpu_custom_call.1} parent=11 // pred_check_branch
          %175 = sbr.rel (%p173) target = $region24
        $region23: #{tpu_custom_call.1} parent=11 // pred_region
          _
        $region24: #{tpu_custom_call.1} parent=11 // pred_fallthru
          _
      $region12: #{tpu_custom_call.1} parent=5 // pred_fallthru
        _
      %p176 = scmp.lt.s32.totalorder %s17, 2
      // Predicated region
      $region25: #{tpu_custom_call.1} parent=5 // pred_check
        %p177 = pneg %p176
      $region26: #{tpu_custom_call.1} parent=5 // pred_check_branch
        %179 = sbr.rel (%p177) target = $region28
      $region27: #{tpu_custom_call.1} parent=5 // pred_region
        // Predicated region
        $region29: #{tpu_custom_call.1} parent=27 // pred_check
          %p180 = pneg %p37
        $region30: #{tpu_custom_call.1} parent=27 // pred_check_branch
          %182 = sbr.rel (%p180) target = $region32
        $region31: #{tpu_custom_call.1} parent=27 // pred_region
          %s183 = sand.u32 %s27, 1
          %s184 = scalar_lea.sflag [#allocation5], %s183
          %s185 = sand.u32 %s27, 1
          %s186 = smul.addr %s185, 16
          %s187 = scalar_lea.vmem [#allocation4], %s186
          %s188 = smul.u32 2, %s17
          %s190 = ssub.s32 256, 256
          %191 = vsyncadd %s184, %s190
          %s192 = smul.addr %s188, 128
          %s193 = scalar_lea.hbm %s0, %s192
          %s194 = sshll.u32 %s187, 4
          %s195 = int_to_ptr.vmem [resolvable:$true] %s194
          %200 = dma.hbm_to_vmem [thread:$0]  %s193, 256, %s195, %s184, 128, 128, 8
        $region32: #{tpu_custom_call.1} parent=27 // pred_fallthru
          _
      $region28: #{tpu_custom_call.1} parent=5 // pred_fallthru
        _
      %p201 = scmp.le.s32.totalorder 1, %s17
      %p202 = scmp.lt.s32.totalorder %s17, 3
      %p203 = pnand %p201, %p202
      %p204 = pneg %p203
      // Predicated region
      $region33: #{tpu_custom_call.1} parent=5 // pred_check
        _
      $region34: #{tpu_custom_call.1} parent=5 // pred_check_branch
        %206 = sbr.rel (%p203) target = $region36
      $region35: #{tpu_custom_call.1} parent=5 // pred_region
        %s207 = ssub.s32 %s17, 1
        %s208 = sand.u32 %s30, 1
        %s209 = scalar_lea.sflag [#allocation5], %s208
        %s210 = sand.u32 %s30, 1
        %s211 = smul.addr %s210, 16
        %s212 = scalar_lea.vmem [#allocation4], %s211
        // Predicated region
        $region37: #{tpu_custom_call.1} parent=35 // pred_check
          %p213 = pneg %p43
        $region38: #{tpu_custom_call.1} parent=35 // pred_check_branch
          %215 = sbr.rel (%p213) target = $region40
        $region39: #{tpu_custom_call.1} parent=35 // pred_region
          %216 = dma.done %s209, 256
        $region40: #{tpu_custom_call.1} parent=35 // pred_fallthru
          _
        // Predicated region
        $region41: #{tpu_custom_call.1} parent=35 // pred_check
          %p217 = pneg %p64
        $region42: #{tpu_custom_call.1} parent=35 // pred_check_branch
          %219 = sbr.rel (%p217) target = $region44
        $region43: #{tpu_custom_call.1} parent=35 // pred_region
          %220 = dma.done [#allocation8], 512
        $region44: #{tpu_custom_call.1} parent=35 // pred_fallthru
          _
        // Predicated region
        $region45: #{tpu_custom_call.1} parent=35 // pred_check
          %p221 = pneg %p85
        $region46: #{tpu_custom_call.1} parent=35 // pred_check_branch
          %223 = sbr.rel (%p221) target = $region48
        $region47: #{tpu_custom_call.1} parent=35 // pred_region
          %224 = dma.done [#allocation8], 512
        $region48: #{tpu_custom_call.1} parent=35 // pred_fallthru
          _
        %s225 = sand.u32 %s30, 1
        %s226 = scalar_lea.sflag [#allocation5], %s225
        %s227 = sand.u32 %s30, 1
        %s228 = smul.addr %s227, 16
        %s229 = scalar_lea.vmem [#allocation4], %s228
        %p230 = pneg %p43
        %p231 = pneg %p40
        %p232 = pneg %p64
        %p233 = pneg %p61
        %p234 = pneg %p85
        %p235 = pneg %p82
        %p236 = pneg %p106
        %p237 = pneg %p103
        %p238 = pneg %p132
        %p239 = pneg %p129
        %s240 = sand.u32 %s119, 1
        %s241 = scalar_lea.sflag [#allocation6], %s240
        %s242 = sand.u32 %s119, 1
        %s243 = smul.addr %s242, 16
        %s244 = scalar_lea.vmem [#allocation10], %s243
        %s245 = smul.u32 2, %s22
        %s246 = smul.u32 2, %s22
        %v247 = vld [vmem:[%s212] sm:$0xff]
        %v248 = vld [vmem:[%s212 + $0x8] sm:$0xff]
        %v249 = vld [vmem:[#allocation7] sm:$0xff]
        %v250 = vld [vmem:[#allocation7 + $0x8] sm:$0xff]
        %v251 = vld [vmem:[#allocation7 + $0x10] sm:$0xff]
        %v252 = vld [vmem:[#allocation7 + $0x18] sm:$0xff]
        %vm253 = vcmask 261120
        %v255 = vsel %vm253, %v247, 0
        %v258 = vsel %vm253, %v248, 0
        %260 = vmatprep.subr.mxu0 0.0
        %261 = vmatpush1.msra.mxu0 %v249
        %262 = vmatprep.subr.mxu0 0.0
        %263 = vmatpush1.msra.mxu0 %v250
        %264 = vmatprep.subr.mxu0 0.0
        %265 = vmatpush1.msra.mxu0 %v251
        %266 = vmatprep.subr.mxu0 0.0
        %267 = vmatpush1.msra.mxu0 %v252
        %268 = vmatprep.subr.mxu0 0.0
        %269 = vmatpush1.msra.mxu0 0.0
        %270 = vmatprep.subr.mxu0 0.0
        %271 = vmatpush1.msra.mxu0 0.0
        %272 = vmatprep.subr.mxu0 0.0
        %273 = vmatpush1.msra.mxu0 0.0
        %274 = vmatprep.subr.mxu0 0.0
        %275 = vmatpush1.msra.mxu0 0.0
        %276 = vmatprep.subr.mxu0 0.0
        %277 = vmatpush1.msra.mxu0 0.0
        %278 = vmatprep.subr.mxu0 0.0
        %279 = vmatpush1.msra.mxu0 0.0
        %280 = vmatprep.subr.mxu0 0.0
        %281 = vmatpush1.msra.mxu0 0.0
        %282 = vmatprep.subr.mxu0 0.0
        %283 = vmatpush1.msra.mxu0 0.0
        %284 = vmatprep.subr.mxu0 0.0
        %285 = vmatpush1.msra.mxu0 0.0
        %286 = vmatprep.subr.mxu0 0.0
        %287 = vmatpush1.msra.mxu0 0.0
        %288 = vmatprep.subr.mxu0 0.0
        %289 = vmatpush1.msra.mxu0 0.0
        %290 = vmatprep.subr.mxu0 0.0
        %291 = vmatpush1.msra.mxu0 0.0
        %292 = vmatprep.subr.mxu0 0.0
        %293 = vmatpush1.msra.mxu0 0.0
        %294 = vmatprep.subr.mxu0 0.0
        %295 = vmatpush1.msra.mxu0 0.0
        %296 = vmatprep.subr.mxu0 0.0
        %297 = vmatpush1.msra.mxu0 0.0
        %298 = vmatprep.subr.mxu0 0.0
        %299 = vmatpush1.msra.mxu0 0.0
        %300 = vmatprep.subr.mxu0 0.0
        %301 = vmatpush1.msra.mxu0 0.0
        %302 = vmatprep.subr.mxu0 0.0
        %303 = vmatpush1.msra.mxu0 0.0
        %304 = vmatprep.subr.mxu0 0.0
        %305 = vmatpush1.msra.mxu0 0.0
        %306 = vmatprep.subr.mxu0 0.0
        %307 = vmatpush1.msra.mxu0 0.0
        %308 = vmatprep.subr.mxu0 0.0
        %309 = vmatpush1.msra.mxu0 0.0
        %310 = vmatprep.subr.mxu0 0.0
        %311 = vmatpush1.msra.mxu0 0.0
        %312 = vmatprep.subr.mxu0 0.0
        %313 = vmatpush1.msra.mxu0 0.0
        %314 = vmatprep.subr.mxu0 0.0
        %315 = vmatpush1.msra.mxu0 0.0
        %316 = vmatprep.subr.mxu0 0.0
        %317 = vmatpush1.msra.mxu0 0.0
        %318 = vmatprep.subr.mxu0 0.0
        %319 = vmatpush1.msra.mxu0 0.0
        %320 = vmatprep.subr.mxu0 0.0
        %321 = vmatpush1.msra.mxu0 0.0
        %322 = vmatprep.subr.mxu0 0.0
        %323 = vmatpush1.msra.mxu0 0.0
        %324 = vmatprep.mubr.f32.mxu0 0.0
        %325 = vmatmul.mubr.f32.gmra.mrb[0].mxu0 %v255
        %v326 = vpop.f32.mrb[0].mxu0
        %v327 = vadd.f32 0.0, %v326
        %v328 = vpop.f32.mrb[0].mxu0
        %329 = vmatprep.mubr.f32.mxu0 0.0
        %330 = vmatmul.mubr.f32.gmra.mrb[0].mxu0 %v258
        %v331 = vpop.f32.mrb[0].mxu0
        %v332 = vadd.f32 0.0, %v331
        %v333 = vpop.f32.mrb[0].mxu0
        %334 = vdwg.mxu0
        %vm335 = vcmask 785408
        %336 = vst.msk [vmem:[#allocation2] sm:$0xff] %vm335, %v327
        %337 = vst.msk [vmem:[#allocation2 + $0x8] sm:$0xff] %vm335, %v332
        %v338 = vld [vmem:[#allocation2] sm:$0xff]
        %v339 = vld [vmem:[#allocation2 + $0x8] sm:$0xff]
        %342 = vrot.lane.b32.xlu0 %v338, 96
        %v343 = vpop.permute.xlu0 %342
        %344 = vrot.lane.b32.xlu0 %v339, 96
        %v345 = vpop.permute.xlu0 %344
        %vm346 = vcmask 31744
        %v347 = vsel %vm346, %v338, 0
        %v349 = vsel %vm346, %v339, 0
        %v351 = vsel %vm346, %v343, 0
        %v353 = vsel %vm346, %v345, 0
        %355 = vmatprep.subr.mxu0 0.0
        %356 = vmatpush1.xpose.msra.mxu0 %v351
        %357 = vmatprep.subr.mxu0 0.0
        %358 = vmatpush1.xpose.msra.mxu0 %v353
        %359 = vmatprep.subr.mxu0 0.0
        %360 = vmatpush1.xpose.msra.mxu0 0.0
        %361 = vmatprep.subr.mxu0 0.0
        %362 = vmatpush1.xpose.msra.mxu0 0.0
        %363 = vmatprep.subr.mxu0 0.0
        %364 = vmatpush1.xpose.msra.mxu0 0.0
        %365 = vmatprep.subr.mxu0 0.0
        %366 = vmatpush1.xpose.msra.mxu0 0.0
        %367 = vmatprep.subr.mxu0 0.0
        %368 = vmatpush1.xpose.msra.mxu0 0.0
        %369 = vmatprep.subr.mxu0 0.0
        %370 = vmatpush1.xpose.msra.mxu0 0.0
        %371 = vmatprep.subr.mxu0 0.0
        %372 = vmatpush1.xpose.msra.mxu0 0.0
        %373 = vmatprep.subr.mxu0 0.0
        %374 = vmatpush1.xpose.msra.mxu0 0.0
        %375 = vmatprep.subr.mxu0 0.0
        %376 = vmatpush1.xpose.msra.mxu0 0.0
        %377 = vmatprep.subr.mxu0 0.0
        %378 = vmatpush1.xpose.msra.mxu0 0.0
        %379 = vmatprep.subr.mxu0 0.0
        %380 = vmatpush1.xpose.msra.mxu0 0.0
        %381 = vmatprep.subr.mxu0 0.0
        %382 = vmatpush1.xpose.msra.mxu0 0.0
        %383 = vmatprep.subr.mxu0 0.0
        %384 = vmatpush1.xpose.msra.mxu0 0.0
        %385 = vmatprep.subr.mxu0 0.0
        %386 = vmatpush1.xpose.msra.mxu0 0.0
        %387 = vmatprep.subr.mxu0 0.0
        %388 = vmatpush1.xpose.msra.mxu0 0.0
        %389 = vmatprep.subr.mxu0 0.0
        %390 = vmatpush1.xpose.msra.mxu0 0.0
        %391 = vmatprep.subr.mxu0 0.0
        %392 = vmatpush1.xpose.msra.mxu0 0.0
        %393 = vmatprep.subr.mxu0 0.0
        %394 = vmatpush1.xpose.msra.mxu0 0.0
        %395 = vmatprep.subr.mxu0 0.0
        %396 = vmatpush1.xpose.msra.mxu0 0.0
        %397 = vmatprep.subr.mxu0 0.0
        %398 = vmatpush1.xpose.msra.mxu0 0.0
        %399 = vmatprep.subr.mxu0 0.0
        %400 = vmatpush1.xpose.msra.mxu0 0.0
        %401 = vmatprep.subr.mxu0 0.0
        %402 = vmatpush1.xpose.msra.mxu0 0.0
        %403 = vmatprep.subr.mxu0 0.0
        %404 = vmatpush1.xpose.msra.mxu0 0.0
        %405 = vmatprep.subr.mxu0 0.0
        %406 = vmatpush1.xpose.msra.mxu0 0.0
        %407 = vmatprep.subr.mxu0 0.0
        %408 = vmatpush1.xpose.msra.mxu0 0.0
        %409 = vmatprep.subr.mxu0 0.0
        %410 = vmatpush1.xpose.msra.mxu0 0.0
        %411 = vmatprep.subr.mxu0 0.0
        %412 = vmatpush1.xpose.msra.mxu0 0.0
        %413 = vmatprep.subr.mxu0 0.0
        %414 = vmatpush1.xpose.msra.mxu0 0.0
        %415 = vmatprep.subr.mxu0 0.0
        %416 = vmatpush1.xpose.msra.mxu0 0.0
        %417 = vmatprep.subr.mxu0 0.0
        %418 = vmatpush1.xpose.msra.mxu0 0.0
        %419 = vmatprep.mubr.f32.mxu0 0.0
        %420 = vmatmul.mubr.f32.gmra.mrb[0].mxu0 %v347
        %v421 = vpop.f32.mrb[0].mxu0
        %v422 = vadd.f32 0.0, %v421
        %v423 = vpop.f32.mrb[0].mxu0
        %424 = vmatprep.mubr.f32.mxu0 0.0
        %425 = vmatmul.mubr.f32.gmra.mrb[0].mxu0 %v349
        %v426 = vpop.f32.mrb[0].mxu0
        %v427 = vadd.f32 0.0, %v426
        %v428 = vpop.f32.mrb[0].mxu0
        %429 = vdwg.mxu0
        %vm430 = vcmask 130048
        %v431 = vsel %vm430, %v422, -inf
        %432 = vmax.xlane.f32.xlu0 %v431
        %v433 = vpop.xlane.xlu0 %432
        %v434 = vsel %vm430, %v427, -inf
        %435 = vmax.xlane.f32.xlu0 %v434
        %v436 = vpop.xlane.xlu0 %435
        %v437 = vsub.f32 %v422, %v433
        %v438 = vsub.f32 %v427, %v436
        %v439 = vmul.f32 %v437, 1.442695
        %v440 = vpow.pop %v439
        %v441 = vmul.f32 %v438, 1.442695
        %v442 = vpow.pop %v441
        %v443 = vsel %vm430, %v440, 0.0
        %444 = vadd.xlane.f32.xlu0 %v443
        %v445 = vpop.xlane.xlu0 %444
        %v446 = vsel %vm430, %v442, 0.0
        %447 = vadd.xlane.f32.xlu0 %v446
        %v448 = vpop.xlane.xlu0 %447
        %v449 = vrcp.pop %v445
        %v450 = vrcp.pop %v448
        %v451 = vmul.f32 %v440, %v449
        %v452 = vmul.f32 %v442, %v450
        %453 = vrot.lane.b32.xlu0 %v338, 64
        %v454 = vpop.permute.xlu0 %453
        %455 = vrot.lane.b32.xlu0 %v339, 64
        %v456 = vpop.permute.xlu0 %455
        %v460 = vsel %vm430, %v451, 0
        %v463 = vsel %vm430, %v452, 0
        %465 = vmatprep.subr.mxu0 0.0
        %466 = vmatpush1.msra.mxu0 %v454
        %467 = vmatprep.subr.mxu0 0.0
        %468 = vmatpush1.msra.mxu0 %v456
        %469 = vmatprep.subr.mxu0 0.0
        %470 = vmatpush1.msra.mxu0 0.0
        %471 = vmatprep.subr.mxu0 0.0
        %472 = vmatpush1.msra.mxu0 0.0
        %473 = vmatprep.subr.mxu0 0.0
        %474 = vmatpush1.msra.mxu0 0.0
        %475 = vmatprep.subr.mxu0 0.0
        %476 = vmatpush1.msra.mxu0 0.0
        %477 = vmatprep.subr.mxu0 0.0
        %478 = vmatpush1.msra.mxu0 0.0
        %479 = vmatprep.subr.mxu0 0.0
        %480 = vmatpush1.msra.mxu0 0.0
        %481 = vmatprep.subr.mxu0 0.0
        %482 = vmatpush1.msra.mxu0 0.0
        %483 = vmatprep.subr.mxu0 0.0
        %484 = vmatpush1.msra.mxu0 0.0
        %485 = vmatprep.subr.mxu0 0.0
        %486 = vmatpush1.msra.mxu0 0.0
        %487 = vmatprep.subr.mxu0 0.0
        %488 = vmatpush1.msra.mxu0 0.0
        %489 = vmatprep.subr.mxu0 0.0
        %490 = vmatpush1.msra.mxu0 0.0
        %491 = vmatprep.subr.mxu0 0.0
        %492 = vmatpush1.msra.mxu0 0.0
        %493 = vmatprep.subr.mxu0 0.0
        %494 = vmatpush1.msra.mxu0 0.0
        %495 = vmatprep.subr.mxu0 0.0
        %496 = vmatpush1.msra.mxu0 0.0
        %497 = vmatprep.subr.mxu0 0.0
        %498 = vmatpush1.msra.mxu0 0.0
        %499 = vmatprep.subr.mxu0 0.0
        %500 = vmatpush1.msra.mxu0 0.0
        %501 = vmatprep.subr.mxu0 0.0
        %502 = vmatpush1.msra.mxu0 0.0
        %503 = vmatprep.subr.mxu0 0.0
        %504 = vmatpush1.msra.mxu0 0.0
        %505 = vmatprep.subr.mxu0 0.0
        %506 = vmatpush1.msra.mxu0 0.0
        %507 = vmatprep.subr.mxu0 0.0
        %508 = vmatpush1.msra.mxu0 0.0
        %509 = vmatprep.subr.mxu0 0.0
        %510 = vmatpush1.msra.mxu0 0.0
        %511 = vmatprep.subr.mxu0 0.0
        %512 = vmatpush1.msra.mxu0 0.0
        %513 = vmatprep.subr.mxu0 0.0
        %514 = vmatpush1.msra.mxu0 0.0
        %515 = vmatprep.subr.mxu0 0.0
        %516 = vmatpush1.msra.mxu0 0.0
        %517 = vmatprep.subr.mxu0 0.0
        %518 = vmatpush1.msra.mxu0 0.0
        %519 = vmatprep.subr.mxu0 0.0
        %520 = vmatpush1.msra.mxu0 0.0
        %521 = vmatprep.subr.mxu0 0.0
        %522 = vmatpush1.msra.mxu0 0.0
        %523 = vmatprep.subr.mxu0 0.0
        %524 = vmatpush1.msra.mxu0 0.0
        %525 = vmatprep.subr.mxu0 0.0
        %526 = vmatpush1.msra.mxu0 0.0
        %527 = vmatprep.subr.mxu0 0.0
        %528 = vmatpush1.msra.mxu0 0.0
        %529 = vmatprep.mubr.f32.mxu0 0.0
        %530 = vmatmul.mubr.f32.gmra.mrb[0].mxu0 %v460
        %v531 = vpop.f32.mrb[0].mxu0
        %v532 = vadd.f32 0.0, %v531
        %v533 = vpop.f32.mrb[0].mxu0
        %534 = vmatprep.mubr.f32.mxu0 0.0
        %535 = vmatmul.mubr.f32.gmra.mrb[0].mxu0 %v463
        %v536 = vpop.f32.mrb[0].mxu0
        %v537 = vadd.f32 0.0, %v536
        %v538 = vpop.f32.mrb[0].mxu0
        %539 = vdwg.mxu0
        %540 = vrot.lane.b32.xlu0 %v338, 124
        %v541 = vpop.permute.xlu0 %540
        %542 = vrot.lane.b32.xlu0 %v339, 124
        %v543 = vpop.permute.xlu0 %542
        %544 = vrot.lane.b32.xlu0 %v338, 92
        %v545 = vpop.permute.xlu0 %544
        %546 = vrot.lane.b32.xlu0 %v339, 92
        %v547 = vpop.permute.xlu0 %546
        %v548 = vsel %vm346, %v541, 0
        %v550 = vsel %vm346, %v543, 0
        %v552 = vsel %vm346, %v545, 0
        %v554 = vsel %vm346, %v547, 0
        %556 = vmatprep.subr.mxu0 0.0
        %557 = vmatpush1.xpose.msra.mxu0 %v552
        %558 = vmatprep.subr.mxu0 0.0
        %559 = vmatpush1.xpose.msra.mxu0 %v554
        %560 = vmatprep.subr.mxu0 0.0
        %561 = vmatpush1.xpose.msra.mxu0 0.0
        %562 = vmatprep.subr.mxu0 0.0
        %563 = vmatpush1.xpose.msra.mxu0 0.0
        %564 = vmatprep.subr.mxu0 0.0
        %565 = vmatpush1.xpose.msra.mxu0 0.0
        %566 = vmatprep.subr.mxu0 0.0
        %567 = vmatpush1.xpose.msra.mxu0 0.0
        %568 = vmatprep.subr.mxu0 0.0
        %569 = vmatpush1.xpose.msra.mxu0 0.0
        %570 = vmatprep.subr.mxu0 0.0
        %571 = vmatpush1.xpose.msra.mxu0 0.0
        %572 = vmatprep.subr.mxu0 0.0
        %573 = vmatpush1.xpose.msra.mxu0 0.0
        %574 = vmatprep.subr.mxu0 0.0
        %575 = vmatpush1.xpose.msra.mxu0 0.0
        %576 = vmatprep.subr.mxu0 0.0
        %577 = vmatpush1.xpose.msra.mxu0 0.0
        %578 = vmatprep.subr.mxu0 0.0
        %579 = vmatpush1.xpose.msra.mxu0 0.0
        %580 = vmatprep.subr.mxu0 0.0
        %581 = vmatpush1.xpose.msra.mxu0 0.0
        %582 = vmatprep.subr.mxu0 0.0
        %583 = vmatpush1.xpose.msra.mxu0 0.0
        %584 = vmatprep.subr.mxu0 0.0
        %585 = vmatpush1.xpose.msra.mxu0 0.0
        %586 = vmatprep.subr.mxu0 0.0
        %587 = vmatpush1.xpose.msra.mxu0 0.0
        %588 = vmatprep.subr.mxu0 0.0
        %589 = vmatpush1.xpose.msra.mxu0 0.0
        %590 = vmatprep.subr.mxu0 0.0
        %591 = vmatpush1.xpose.msra.mxu0 0.0
        %592 = vmatprep.subr.mxu0 0.0
        %593 = vmatpush1.xpose.msra.mxu0 0.0
        %594 = vmatprep.subr.mxu0 0.0
        %595 = vmatpush1.xpose.msra.mxu0 0.0
        %596 = vmatprep.subr.mxu0 0.0
        %597 = vmatpush1.xpose.msra.mxu0 0.0
        %598 = vmatprep.subr.mxu0 0.0
        %599 = vmatpush1.xpose.msra.mxu0 0.0
        %600 = vmatprep.subr.mxu0 0.0
        %601 = vmatpush1.xpose.msra.mxu0 0.0
        %602 = vmatprep.subr.mxu0 0.0
        %603 = vmatpush1.xpose.msra.mxu0 0.0
        %604 = vmatprep.subr.mxu0 0.0
        %605 = vmatpush1.xpose.msra.mxu0 0.0
        %606 = vmatprep.subr.mxu0 0.0
        %607 = vmatpush1.xpose.msra.mxu0 0.0
        %608 = vmatprep.subr.mxu0 0.0
        %609 = vmatpush1.xpose.msra.mxu0 0.0
        %610 = vmatprep.subr.mxu0 0.0
        %611 = vmatpush1.xpose.msra.mxu0 0.0
        %612 = vmatprep.subr.mxu0 0.0
        %613 = vmatpush1.xpose.msra.mxu0 0.0
        %614 = vmatprep.subr.mxu0 0.0
        %615 = vmatpush1.xpose.msra.mxu0 0.0
        %616 = vmatprep.subr.mxu0 0.0
        %617 = vmatpush1.xpose.msra.mxu0 0.0
        %618 = vmatprep.subr.mxu0 0.0
        %619 = vmatpush1.xpose.msra.mxu0 0.0
        %620 = vmatprep.mubr.f32.mxu0 0.0
        %621 = vmatmul.mubr.f32.gmra.mrb[0].mxu0 %v548
        %v622 = vpop.f32.mrb[0].mxu0
        %v623 = vadd.f32 0.0, %v622
        %v624 = vpop.f32.mrb[0].mxu0
        %625 = vmatprep.mubr.f32.mxu0 0.0
        %626 = vmatmul.mubr.f32.gmra.mrb[0].mxu0 %v550
        %v627 = vpop.f32.mrb[0].mxu0
        %v628 = vadd.f32 0.0, %v627
        %v629 = vpop.f32.mrb[0].mxu0
        %630 = vdwg.mxu0
        %v631 = vsel %vm430, %v623, -inf
        %632 = vmax.xlane.f32.xlu0 %v631
        %v633 = vpop.xlane.xlu0 %632
        %v634 = vsel %vm430, %v628, -inf
        %635 = vmax.xlane.f32.xlu0 %v634
        %v636 = vpop.xlane.xlu0 %635
        %v637 = vsub.f32 %v623, %v633
        %v638 = vsub.f32 %v628, %v636
        %v639 = vmul.f32 %v637, 1.442695
        %v640 = vpow.pop %v639
        %v641 = vmul.f32 %v638, 1.442695
        %v642 = vpow.pop %v641
        %v643 = vsel %vm430, %v640, 0.0
        %644 = vadd.xlane.f32.xlu0 %v643
        %v645 = vpop.xlane.xlu0 %644
        %v646 = vsel %vm430, %v642, 0.0
        %647 = vadd.xlane.f32.xlu0 %v646
        %v648 = vpop.xlane.xlu0 %647
        %v649 = vrcp.pop %v645
        %v650 = vrcp.pop %v648
        %v651 = vmul.f32 %v640, %v649
        %v652 = vmul.f32 %v642, %v650
        %653 = vrot.lane.b32.xlu0 %v338, 60
        %v654 = vpop.permute.xlu0 %653
        %655 = vrot.lane.b32.xlu0 %v339, 60
        %v656 = vpop.permute.xlu0 %655
        %v660 = vsel %vm430, %v651, 0
        %v663 = vsel %vm430, %v652, 0
        %665 = vmatprep.subr.mxu0 0.0
        %666 = vmatpush1.msra.mxu0 %v654
        %667 = vmatprep.subr.mxu0 0.0
        %668 = vmatpush1.msra.mxu0 %v656
        %669 = vmatprep.subr.mxu0 0.0
        %670 = vmatpush1.msra.mxu0 0.0
        %671 = vmatprep.subr.mxu0 0.0
        %672 = vmatpush1.msra.mxu0 0.0
        %673 = vmatprep.subr.mxu0 0.0
        %674 = vmatpush1.msra.mxu0 0.0
        %675 = vmatprep.subr.mxu0 0.0
        %676 = vmatpush1.msra.mxu0 0.0
        %677 = vmatprep.subr.mxu0 0.0
        %678 = vmatpush1.msra.mxu0 0.0
        %679 = vmatprep.subr.mxu0 0.0
        %680 = vmatpush1.msra.mxu0 0.0
        %681 = vmatprep.subr.mxu0 0.0
        %682 = vmatpush1.msra.mxu0 0.0
        %683 = vmatprep.subr.mxu0 0.0
        %684 = vmatpush1.msra.mxu0 0.0
        %685 = vmatprep.subr.mxu0 0.0
        %686 = vmatpush1.msra.mxu0 0.0
        %687 = vmatprep.subr.mxu0 0.0
        %688 = vmatpush1.msra.mxu0 0.0
        %689 = vmatprep.subr.mxu0 0.0
        %690 = vmatpush1.msra.mxu0 0.0
        %691 = vmatprep.subr.mxu0 0.0
        %692 = vmatpush1.msra.mxu0 0.0
        %693 = vmatprep.subr.mxu0 0.0
        %694 = vmatpush1.msra.mxu0 0.0
        %695 = vmatprep.subr.mxu0 0.0
        %696 = vmatpush1.msra.mxu0 0.0
        %697 = vmatprep.subr.mxu0 0.0
        %698 = vmatpush1.msra.mxu0 0.0
        %699 = vmatprep.subr.mxu0 0.0
        %700 = vmatpush1.msra.mxu0 0.0
        %701 = vmatprep.subr.mxu0 0.0
        %702 = vmatpush1.msra.mxu0 0.0
        %703 = vmatprep.subr.mxu0 0.0
        %704 = vmatpush1.msra.mxu0 0.0
        %705 = vmatprep.subr.mxu0 0.0
        %706 = vmatpush1.msra.mxu0 0.0
        %707 = vmatprep.subr.mxu0 0.0
        %708 = vmatpush1.msra.mxu0 0.0
        %709 = vmatprep.subr.mxu0 0.0
        %710 = vmatpush1.msra.mxu0 0.0
        %711 = vmatprep.subr.mxu0 0.0
        %712 = vmatpush1.msra.mxu0 0.0
        %713 = vmatprep.subr.mxu0 0.0
        %714 = vmatpush1.msra.mxu0 0.0
        %715 = vmatprep.subr.mxu0 0.0
        %716 = vmatpush1.msra.mxu0 0.0
        %717 = vmatprep.subr.mxu0 0.0
        %718 = vmatpush1.msra.mxu0 0.0
        %719 = vmatprep.subr.mxu0 0.0
        %720 = vmatpush1.msra.mxu0 0.0
        %721 = vmatprep.subr.mxu0 0.0
        %722 = vmatpush1.msra.mxu0 0.0
        %723 = vmatprep.subr.mxu0 0.0
        %724 = vmatpush1.msra.mxu0 0.0
        %725 = vmatprep.subr.mxu0 0.0
        %726 = vmatpush1.msra.mxu0 0.0
        %727 = vmatprep.subr.mxu0 0.0
        %728 = vmatpush1.msra.mxu0 0.0
        %729 = vmatprep.mubr.f32.mxu0 0.0
        %730 = vmatmul.mubr.f32.gmra.mrb[0].mxu0 %v660
        %v731 = vpop.f32.mrb[0].mxu0
        %v732 = vadd.f32 0.0, %v731
        %v733 = vpop.f32.mrb[0].mxu0
        %734 = vmatprep.mubr.f32.mxu0 0.0
        %735 = vmatmul.mubr.f32.gmra.mrb[0].mxu0 %v663
        %v736 = vpop.f32.mrb[0].mxu0
        %v737 = vadd.f32 0.0, %v736
        %v738 = vpop.f32.mrb[0].mxu0
        %739 = vdwg.mxu0
        %740 = vrot.lane.b32.xlu0 %v338, 120
        %v741 = vpop.permute.xlu0 %740
        %742 = vrot.lane.b32.xlu0 %v339, 120
        %v743 = vpop.permute.xlu0 %742
        %744 = vrot.lane.b32.xlu0 %v338, 88
        %v745 = vpop.permute.xlu0 %744
        %746 = vrot.lane.b32.xlu0 %v339, 88
        %v747 = vpop.permute.xlu0 %746
        %v748 = vsel %vm346, %v741, 0
        %v750 = vsel %vm346, %v743, 0
        %v752 = vsel %vm346, %v745, 0
        %v754 = vsel %vm346, %v747, 0
        %756 = vmatprep.subr.mxu0 0.0
        %757 = vmatpush1.xpose.msra.mxu0 %v752
        %758 = vmatprep.subr.mxu0 0.0
        %759 = vmatpush1.xpose.msra.mxu0 %v754
        %760 = vmatprep.subr.mxu0 0.0
        %761 = vmatpush1.xpose.msra.mxu0 0.0
        %762 = vmatprep.subr.mxu0 0.0
        %763 = vmatpush1.xpose.msra.mxu0 0.0
        %764 = vmatprep.subr.mxu0 0.0
        %765 = vmatpush1.xpose.msra.mxu0 0.0
        %766 = vmatprep.subr.mxu0 0.0
        %767 = vmatpush1.xpose.msra.mxu0 0.0
        %768 = vmatprep.subr.mxu0 0.0
        %769 = vmatpush1.xpose.msra.mxu0 0.0
        %770 = vmatprep.subr.mxu0 0.0
        %771 = vmatpush1.xpose.msra.mxu0 0.0
        %772 = vmatprep.subr.mxu0 0.0
        %773 = vmatpush1.xpose.msra.mxu0 0.0
        %774 = vmatprep.subr.mxu0 0.0
        %775 = vmatpush1.xpose.msra.mxu0 0.0
        %776 = vmatprep.subr.mxu0 0.0
        %777 = vmatpush1.xpose.msra.mxu0 0.0
        %778 = vmatprep.subr.mxu0 0.0
        %779 = vmatpush1.xpose.msra.mxu0 0.0
        %780 = vmatprep.subr.mxu0 0.0
        %781 = vmatpush1.xpose.msra.mxu0 0.0
        %782 = vmatprep.subr.mxu0 0.0
        %783 = vmatpush1.xpose.msra.mxu0 0.0
        %784 = vmatprep.subr.mxu0 0.0
        %785 = vmatpush1.xpose.msra.mxu0 0.0
        %786 = vmatprep.subr.mxu0 0.0
        %787 = vmatpush1.xpose.msra.mxu0 0.0
        %788 = vmatprep.subr.mxu0 0.0
        %789 = vmatpush1.xpose.msra.mxu0 0.0
        %790 = vmatprep.subr.mxu0 0.0
        %791 = vmatpush1.xpose.msra.mxu0 0.0
        %792 = vmatprep.subr.mxu0 0.0
        %793 = vmatpush1.xpose.msra.mxu0 0.0
        %794 = vmatprep.subr.mxu0 0.0
        %795 = vmatpush1.xpose.msra.mxu0 0.0
        %796 = vmatprep.subr.mxu0 0.0
        %797 = vmatpush1.xpose.msra.mxu0 0.0
        %798 = vmatprep.subr.mxu0 0.0
        %799 = vmatpush1.xpose.msra.mxu0 0.0
        %800 = vmatprep.subr.mxu0 0.0
        %801 = vmatpush1.xpose.msra.mxu0 0.0
        %802 = vmatprep.subr.mxu0 0.0
        %803 = vmatpush1.xpose.msra.mxu0 0.0
        %804 = vmatprep.subr.mxu0 0.0
        %805 = vmatpush1.xpose.msra.mxu0 0.0
        %806 = vmatprep.subr.mxu0 0.0
        %807 = vmatpush1.xpose.msra.mxu0 0.0
        %808 = vmatprep.subr.mxu0 0.0
        %809 = vmatpush1.xpose.msra.mxu0 0.0
        %810 = vmatprep.subr.mxu0 0.0
        %811 = vmatpush1.xpose.msra.mxu0 0.0
        %812 = vmatprep.subr.mxu0 0.0
        %813 = vmatpush1.xpose.msra.mxu0 0.0
        %814 = vmatprep.subr.mxu0 0.0
        %815 = vmatpush1.xpose.msra.mxu0 0.0
        %816 = vmatprep.subr.mxu0 0.0
        %817 = vmatpush1.xpose.msra.mxu0 0.0
        %818 = vmatprep.subr.mxu0 0.0
        %819 = vmatpush1.xpose.msra.mxu0 0.0
        %820 = vmatprep.mubr.f32.mxu0 0.0
        %821 = vmatmul.mubr.f32.gmra.mrb[0].mxu0 %v748
        %v822 = vpop.f32.mrb[0].mxu0
        %v823 = vadd.f32 0.0, %v822
        %v824 = vpop.f32.mrb[0].mxu0
        %825 = vmatprep.mubr.f32.mxu0 0.0
        %826 = vmatmul.mubr.f32.gmra.mrb[0].mxu0 %v750
        %v827 = vpop.f32.mrb[0].mxu0
        %v828 = vadd.f32 0.0, %v827
        %v829 = vpop.f32.mrb[0].mxu0
        %830 = vdwg.mxu0
        %v831 = vsel %vm430, %v823, -inf
        %832 = vmax.xlane.f32.xlu0 %v831
        %v833 = vpop.xlane.xlu0 %832
        %v834 = vsel %vm430, %v828, -inf
        %835 = vmax.xlane.f32.xlu0 %v834
        %v836 = vpop.xlane.xlu0 %835
        %v837 = vsub.f32 %v823, %v833
        %v838 = vsub.f32 %v828, %v836
        %v839 = vmul.f32 %v837, 1.442695
        %v840 = vpow.pop %v839
        %v841 = vmul.f32 %v838, 1.442695
        %v842 = vpow.pop %v841
        %v843 = vsel %vm430, %v840, 0.0
        %844 = vadd.xlane.f32.xlu0 %v843
        %v845 = vpop.xlane.xlu0 %844
        %v846 = vsel %vm430, %v842, 0.0
        %847 = vadd.xlane.f32.xlu0 %v846
        %v848 = vpop.xlane.xlu0 %847
        %v849 = vrcp.pop %v845
        %v850 = vrcp.pop %v848
        %v851 = vmul.f32 %v840, %v849
        %v852 = vmul.f32 %v842, %v850
        %853 = vrot.lane.b32.xlu0 %v338, 56
        %v854 = vpop.permute.xlu0 %853
        %855 = vrot.lane.b32.xlu0 %v339, 56
        %v856 = vpop.permute.xlu0 %855
        %v860 = vsel %vm430, %v851, 0
        %v863 = vsel %vm430, %v852, 0
        %865 = vmatprep.subr.mxu0 0.0
        %866 = vmatpush1.msra.mxu0 %v854
        %867 = vmatprep.subr.mxu0 0.0
        %868 = vmatpush1.msra.mxu0 %v856
        %869 = vmatprep.subr.mxu0 0.0
        %870 = vmatpush1.msra.mxu0 0.0
        %871 = vmatprep.subr.mxu0 0.0
        %872 = vmatpush1.msra.mxu0 0.0
        %873 = vmatprep.subr.mxu0 0.0
        %874 = vmatpush1.msra.mxu0 0.0
        %875 = vmatprep.subr.mxu0 0.0
        %876 = vmatpush1.msra.mxu0 0.0
        %877 = vmatprep.subr.mxu0 0.0
        %878 = vmatpush1.msra.mxu0 0.0
        %879 = vmatprep.subr.mxu0 0.0
        %880 = vmatpush1.msra.mxu0 0.0
        %881 = vmatprep.subr.mxu0 0.0
        %882 = vmatpush1.msra.mxu0 0.0
        %883 = vmatprep.subr.mxu0 0.0
        %884 = vmatpush1.msra.mxu0 0.0
        %885 = vmatprep.subr.mxu0 0.0
        %886 = vmatpush1.msra.mxu0 0.0
        %887 = vmatprep.subr.mxu0 0.0
        %888 = vmatpush1.msra.mxu0 0.0
        %889 = vmatprep.subr.mxu0 0.0
        %890 = vmatpush1.msra.mxu0 0.0
        %891 = vmatprep.subr.mxu0 0.0
        %892 = vmatpush1.msra.mxu0 0.0
        %893 = vmatprep.subr.mxu0 0.0
        %894 = vmatpush1.msra.mxu0 0.0
        %895 = vmatprep.subr.mxu0 0.0
        %896 = vmatpush1.msra.mxu0 0.0
        %897 = vmatprep.subr.mxu0 0.0
        %898 = vmatpush1.msra.mxu0 0.0
        %899 = vmatprep.subr.mxu0 0.0
        %900 = vmatpush1.msra.mxu0 0.0
        %901 = vmatprep.subr.mxu0 0.0
        %902 = vmatpush1.msra.mxu0 0.0
        %903 = vmatprep.subr.mxu0 0.0
        %904 = vmatpush1.msra.mxu0 0.0
        %905 = vmatprep.subr.mxu0 0.0
        %906 = vmatpush1.msra.mxu0 0.0
        %907 = vmatprep.subr.mxu0 0.0
        %908 = vmatpush1.msra.mxu0 0.0
        %909 = vmatprep.subr.mxu0 0.0
        %910 = vmatpush1.msra.mxu0 0.0
        %911 = vmatprep.subr.mxu0 0.0
        %912 = vmatpush1.msra.mxu0 0.0
        %913 = vmatprep.subr.mxu0 0.0
        %914 = vmatpush1.msra.mxu0 0.0
        %915 = vmatprep.subr.mxu0 0.0
        %916 = vmatpush1.msra.mxu0 0.0
        %917 = vmatprep.subr.mxu0 0.0
        %918 = vmatpush1.msra.mxu0 0.0
        %919 = vmatprep.subr.mxu0 0.0
        %920 = vmatpush1.msra.mxu0 0.0
        %921 = vmatprep.subr.mxu0 0.0
        %922 = vmatpush1.msra.mxu0 0.0
        %923 = vmatprep.subr.mxu0 0.0
        %924 = vmatpush1.msra.mxu0 0.0
        %925 = vmatprep.subr.mxu0 0.0
        %926 = vmatpush1.msra.mxu0 0.0
        %927 = vmatprep.subr.mxu0 0.0
        %928 = vmatpush1.msra.mxu0 0.0
        %929 = vmatprep.mubr.f32.mxu0 0.0
        %930 = vmatmul.mubr.f32.gmra.mrb[0].mxu0 %v860
        %v931 = vpop.f32.mrb[0].mxu0
        %v932 = vadd.f32 0.0, %v931
        %v933 = vpop.f32.mrb[0].mxu0
        %934 = vmatprep.mubr.f32.mxu0 0.0
        %935 = vmatmul.mubr.f32.gmra.mrb[0].mxu0 %v863
        %v936 = vpop.f32.mrb[0].mxu0
        %v937 = vadd.f32 0.0, %v936
        %v938 = vpop.f32.mrb[0].mxu0
        %939 = vdwg.mxu0
        %940 = vrot.lane.b32.xlu0 %v338, 116
        %v941 = vpop.permute.xlu0 %940
        %942 = vrot.lane.b32.xlu0 %v339, 116
        %v943 = vpop.permute.xlu0 %942
        %944 = vrot.lane.b32.xlu0 %v338, 84
        %v945 = vpop.permute.xlu0 %944
        %946 = vrot.lane.b32.xlu0 %v339, 84
        %v947 = vpop.permute.xlu0 %946
        %v948 = vsel %vm346, %v941, 0
        %v950 = vsel %vm346, %v943, 0
        %v952 = vsel %vm346, %v945, 0
        %v954 = vsel %vm346, %v947, 0
        %956 = vmatprep.subr.mxu0 0.0
        %957 = vmatpush1.xpose.msra.mxu0 %v952
        %958 = vmatprep.subr.mxu0 0.0
        %959 = vmatpush1.xpose.msra.mxu0 %v954
        %960 = vmatprep.subr.mxu0 0.0
        %961 = vmatpush1.xpose.msra.mxu0 0.0
        %962 = vmatprep.subr.mxu0 0.0
        %963 = vmatpush1.xpose.msra.mxu0 0.0
        %964 = vmatprep.subr.mxu0 0.0
        %965 = vmatpush1.xpose.msra.mxu0 0.0
        %966 = vmatprep.subr.mxu0 0.0
        %967 = vmatpush1.xpose.msra.mxu0 0.0
        %968 = vmatprep.subr.mxu0 0.0
        %969 = vmatpush1.xpose.msra.mxu0 0.0
        %970 = vmatprep.subr.mxu0 0.0
        %971 = vmatpush1.xpose.msra.mxu0 0.0
        %972 = vmatprep.subr.mxu0 0.0
        %973 = vmatpush1.xpose.msra.mxu0 0.0
        %974 = vmatprep.subr.mxu0 0.0
        %975 = vmatpush1.xpose.msra.mxu0 0.0
        %976 = vmatprep.subr.mxu0 0.0
        %977 = vmatpush1.xpose.msra.mxu0 0.0
        %978 = vmatprep.subr.mxu0 0.0
        %979 = vmatpush1.xpose.msra.mxu0 0.0
        %980 = vmatprep.subr.mxu0 0.0
        %981 = vmatpush1.xpose.msra.mxu0 0.0
        %982 = vmatprep.subr.mxu0 0.0
        %983 = vmatpush1.xpose.msra.mxu0 0.0
        %984 = vmatprep.subr.mxu0 0.0
        %985 = vmatpush1.xpose.msra.mxu0 0.0
        %986 = vmatprep.subr.mxu0 0.0
        %987 = vmatpush1.xpose.msra.mxu0 0.0
        %988 = vmatprep.subr.mxu0 0.0
        %989 = vmatpush1.xpose.msra.mxu0 0.0
        %990 = vmatprep.subr.mxu0 0.0
        %991 = vmatpush1.xpose.msra.mxu0 0.0
        %992 = vmatprep.subr.mxu0 0.0
        %993 = vmatpush1.xpose.msra.mxu0 0.0
        %994 = vmatprep.subr.mxu0 0.0
        %995 = vmatpush1.xpose.msra.mxu0 0.0
        %996 = vmatprep.subr.mxu0 0.0
        %997 = vmatpush1.xpose.msra.mxu0 0.0
        %998 = vmatprep.subr.mxu0 0.0
        %999 = vmatpush1.xpose.msra.mxu0 0.0
        %1000 = vmatprep.subr.mxu0 0.0
        %1001 = vmatpush1.xpose.msra.mxu0 0.0
        %1002 = vmatprep.subr.mxu0 0.0
        %1003 = vmatpush1.xpose.msra.mxu0 0.0
        %1004 = vmatprep.subr.mxu0 0.0
        %1005 = vmatpush1.xpose.msra.mxu0 0.0
        %1006 = vmatprep.subr.mxu0 0.0
        %1007 = vmatpush1.xpose.msra.mxu0 0.0
        %1008 = vmatprep.subr.mxu0 0.0
        %1009 = vmatpush1.xpose.msra.mxu0 0.0
        %1010 = vmatprep.subr.mxu0 0.0
        %1011 = vmatpush1.xpose.msra.mxu0 0.0
        %1012 = vmatprep.subr.mxu0 0.0
        %1013 = vmatpush1.xpose.msra.mxu0 0.0
        %1014 = vmatprep.subr.mxu0 0.0
        %1015 = vmatpush1.xpose.msra.mxu0 0.0
        %1016 = vmatprep.subr.mxu0 0.0
        %1017 = vmatpush1.xpose.msra.mxu0 0.0
        %1018 = vmatprep.subr.mxu0 0.0
        %1019 = vmatpush1.xpose.msra.mxu0 0.0
        %1020 = vmatprep.mubr.f32.mxu0 0.0
        %1021 = vmatmul.mubr.f32.gmra.mrb[0].mxu0 %v948
        %v1022 = vpop.f32.mrb[0].mxu0
        %v1023 = vadd.f32 0.0, %v1022
        %v1024 = vpop.f32.mrb[0].mxu0
        %1025 = vmatprep.mubr.f32.mxu0 0.0
        %1026 = vmatmul.mubr.f32.gmra.mrb[0].mxu0 %v950
        %v1027 = vpop.f32.mrb[0].mxu0
        %v1028 = vadd.f32 0.0, %v1027
        %v1029 = vpop.f32.mrb[0].mxu0
        %1030 = vdwg.mxu0
        %v1031 = vsel %vm430, %v1023, -inf
        %1032 = vmax.xlane.f32.xlu0 %v1031
        %v1033 = vpop.xlane.xlu0 %1032
        %v1034 = vsel %vm430, %v1028, -inf
        %1035 = vmax.xlane.f32.xlu0 %v1034
        %v1036 = vpop.xlane.xlu0 %1035
        %v1037 = vsub.f32 %v1023, %v1033
        %v1038 = vsub.f32 %v1028, %v1036
        %v1039 = vmul.f32 %v1037, 1.442695
        %v1040 = vpow.pop %v1039
        %v1041 = vmul.f32 %v1038, 1.442695
        %v1042 = vpow.pop %v1041
        %v1043 = vsel %vm430, %v1040, 0.0
        %1044 = vadd.xlane.f32.xlu0 %v1043
        %v1045 = vpop.xlane.xlu0 %1044
        %v1046 = vsel %vm430, %v1042, 0.0
        %1047 = vadd.xlane.f32.xlu0 %v1046
        %v1048 = vpop.xlane.xlu0 %1047
        %v1049 = vrcp.pop %v1045
        %v1050 = vrcp.pop %v1048
        %v1051 = vmul.f32 %v1040, %v1049
        %v1052 = vmul.f32 %v1042, %v1050
        %1053 = vrot.lane.b32.xlu0 %v338, 52
        %v1054 = vpop.permute.xlu0 %1053
        %1055 = vrot.lane.b32.xlu0 %v339, 52
        %v1056 = vpop.permute.xlu0 %1055
        %v1060 = vsel %vm430, %v1051, 0
        %v1063 = vsel %vm430, %v1052, 0
        %1065 = vmatprep.subr.mxu0 0.0
        %1066 = vmatpush1.msra.mxu0 %v1054
        %1067 = vmatprep.subr.mxu0 0.0
        %1068 = vmatpush1.msra.mxu0 %v1056
        %1069 = vmatprep.subr.mxu0 0.0
        %1070 = vmatpush1.msra.mxu0 0.0
        %1071 = vmatprep.subr.mxu0 0.0
        %1072 = vmatpush1.msra.mxu0 0.0
        %1073 = vmatprep.subr.mxu0 0.0
        %1074 = vmatpush1.msra.mxu0 0.0
        %1075 = vmatprep.subr.mxu0 0.0
        %1076 = vmatpush1.msra.mxu0 0.0
        %1077 = vmatprep.subr.mxu0 0.0
        %1078 = vmatpush1.msra.mxu0 0.0
        %1079 = vmatprep.subr.mxu0 0.0
        %1080 = vmatpush1.msra.mxu0 0.0
        %1081 = vmatprep.subr.mxu0 0.0
        %1082 = vmatpush1.msra.mxu0 0.0
        %1083 = vmatprep.subr.mxu0 0.0
        %1084 = vmatpush1.msra.mxu0 0.0
        %1085 = vmatprep.subr.mxu0 0.0
        %1086 = vmatpush1.msra.mxu0 0.0
        %1087 = vmatprep.subr.mxu0 0.0
        %1088 = vmatpush1.msra.mxu0 0.0
        %1089 = vmatprep.subr.mxu0 0.0
        %1090 = vmatpush1.msra.mxu0 0.0
        %1091 = vmatprep.subr.mxu0 0.0
        %1092 = vmatpush1.msra.mxu0 0.0
        %1093 = vmatprep.subr.mxu0 0.0
        %1094 = vmatpush1.msra.mxu0 0.0
        %1095 = vmatprep.subr.mxu0 0.0
        %1096 = vmatpush1.msra.mxu0 0.0
        %1097 = vmatprep.subr.mxu0 0.0
        %1098 = vmatpush1.msra.mxu0 0.0
        %1099 = vmatprep.subr.mxu0 0.0
        %1100 = vmatpush1.msra.mxu0 0.0
        %1101 = vmatprep.subr.mxu0 0.0
        %1102 = vmatpush1.msra.mxu0 0.0
        %1103 = vmatprep.subr.mxu0 0.0
        %1104 = vmatpush1.msra.mxu0 0.0
        %1105 = vmatprep.subr.mxu0 0.0
        %1106 = vmatpush1.msra.mxu0 0.0
        %1107 = vmatprep.subr.mxu0 0.0
        %1108 = vmatpush1.msra.mxu0 0.0
        %1109 = vmatprep.subr.mxu0 0.0
        %1110 = vmatpush1.msra.mxu0 0.0
        %1111 = vmatprep.subr.mxu0 0.0
        %1112 = vmatpush1.msra.mxu0 0.0
        %1113 = vmatprep.subr.mxu0 0.0
        %1114 = vmatpush1.msra.mxu0 0.0
        %1115 = vmatprep.subr.mxu0 0.0
        %1116 = vmatpush1.msra.mxu0 0.0
        %1117 = vmatprep.subr.mxu0 0.0
        %1118 = vmatpush1.msra.mxu0 0.0
        %1119 = vmatprep.subr.mxu0 0.0
        %1120 = vmatpush1.msra.mxu0 0.0
        %1121 = vmatprep.subr.mxu0 0.0
        %1122 = vmatpush1.msra.mxu0 0.0
        %1123 = vmatprep.subr.mxu0 0.0
        %1124 = vmatpush1.msra.mxu0 0.0
        %1125 = vmatprep.subr.mxu0 0.0
        %1126 = vmatpush1.msra.mxu0 0.0
        %1127 = vmatprep.subr.mxu0 0.0
        %1128 = vmatpush1.msra.mxu0 0.0
        %1129 = vmatprep.mubr.f32.mxu0 0.0
        %1130 = vmatmul.mubr.f32.gmra.mrb[0].mxu0 %v1060
        %v1131 = vpop.f32.mrb[0].mxu0
        %v1132 = vadd.f32 0.0, %v1131
        %v1133 = vpop.f32.mrb[0].mxu0
        %1134 = vmatprep.mubr.f32.mxu0 0.0
        %1135 = vmatmul.mubr.f32.gmra.mrb[0].mxu0 %v1063
        %v1136 = vpop.f32.mrb[0].mxu0
        %v1137 = vadd.f32 0.0, %v1136
        %v1138 = vpop.f32.mrb[0].mxu0
        %1139 = vdwg.mxu0
        %1140 = vrot.lane.b32.xlu0 %v338, 112
        %v1141 = vpop.permute.xlu0 %1140
        %1142 = vrot.lane.b32.xlu0 %v339, 112
        %v1143 = vpop.permute.xlu0 %1142
        %1144 = vrot.lane.b32.xlu0 %v338, 80
        %v1145 = vpop.permute.xlu0 %1144
        %1146 = vrot.lane.b32.xlu0 %v339, 80
        %v1147 = vpop.permute.xlu0 %1146
        %v1148 = vsel %vm346, %v1141, 0
        %v1150 = vsel %vm346, %v1143, 0
        %v1152 = vsel %vm346, %v1145, 0
        %v1154 = vsel %vm346, %v1147, 0
        %1156 = vmatprep.subr.mxu0 0.0
        %1157 = vmatpush1.xpose.msra.mxu0 %v1152
        %1158 = vmatprep.subr.mxu0 0.0
        %1159 = vmatpush1.xpose.msra.mxu0 %v1154
        %1160 = vmatprep.subr.mxu0 0.0
        %1161 = vmatpush1.xpose.msra.mxu0 0.0
        %1162 = vmatprep.subr.mxu0 0.0
        %1163 = vmatpush1.xpose.msra.mxu0 0.0
        %1164 = vmatprep.subr.mxu0 0.0
        %1165 = vmatpush1.xpose.msra.mxu0 0.0
        %1166 = vmatprep.subr.mxu0 0.0
        %1167 = vmatpush1.xpose.msra.mxu0 0.0
        %1168 = vmatprep.subr.mxu0 0.0
        %1169 = vmatpush1.xpose.msra.mxu0 0.0
        %1170 = vmatprep.subr.mxu0 0.0
        %1171 = vmatpush1.xpose.msra.mxu0 0.0
        %1172 = vmatprep.subr.mxu0 0.0
        %1173 = vmatpush1.xpose.msra.mxu0 0.0
        %1174 = vmatprep.subr.mxu0 0.0
        %1175 = vmatpush1.xpose.msra.mxu0 0.0
        %1176 = vmatprep.subr.mxu0 0.0
        %1177 = vmatpush1.xpose.msra.mxu0 0.0
        %1178 = vmatprep.subr.mxu0 0.0
        %1179 = vmatpush1.xpose.msra.mxu0 0.0
        %1180 = vmatprep.subr.mxu0 0.0
        %1181 = vmatpush1.xpose.msra.mxu0 0.0
        %1182 = vmatprep.subr.mxu0 0.0
        %1183 = vmatpush1.xpose.msra.mxu0 0.0
        %1184 = vmatprep.subr.mxu0 0.0
        %1185 = vmatpush1.xpose.msra.mxu0 0.0
        %1186 = vmatprep.subr.mxu0 0.0
        %1187 = vmatpush1.xpose.msra.mxu0 0.0
        %1188 = vmatprep.subr.mxu0 0.0
        %1189 = vmatpush1.xpose.msra.mxu0 0.0
        %1190 = vmatprep.subr.mxu0 0.0
        %1191 = vmatpush1.xpose.msra.mxu0 0.0
        %1192 = vmatprep.subr.mxu0 0.0
        %1193 = vmatpush1.xpose.msra.mxu0 0.0
        %1194 = vmatprep.subr.mxu0 0.0
        %1195 = vmatpush1.xpose.msra.mxu0 0.0
        %1196 = vmatprep.subr.mxu0 0.0
        %1197 = vmatpush1.xpose.msra.mxu0 0.0
        %1198 = vmatprep.subr.mxu0 0.0
        %1199 = vmatpush1.xpose.msra.mxu0 0.0
        %1200 = vmatprep.subr.mxu0 0.0
        %1201 = vmatpush1.xpose.msra.mxu0 0.0
        %1202 = vmatprep.subr.mxu0 0.0
        %1203 = vmatpush1.xpose.msra.mxu0 0.0
        %1204 = vmatprep.subr.mxu0 0.0
        %1205 = vmatpush1.xpose.msra.mxu0 0.0
        %1206 = vmatprep.subr.mxu0 0.0
        %1207 = vmatpush1.xpose.msra.mxu0 0.0
        %1208 = vmatprep.subr.mxu0 0.0
        %1209 = vmatpush1.xpose.msra.mxu0 0.0
        %1210 = vmatprep.subr.mxu0 0.0
        %1211 = vmatpush1.xpose.msra.mxu0 0.0
        %1212 = vmatprep.subr.mxu0 0.0
        %1213 = vmatpush1.xpose.msra.mxu0 0.0
        %1214 = vmatprep.subr.mxu0 0.0
        %1215 = vmatpush1.xpose.msra.mxu0 0.0
        %1216 = vmatprep.subr.mxu0 0.0
        %1217 = vmatpush1.xpose.msra.mxu0 0.0
        %1218 = vmatprep.subr.mxu0 0.0
        %1219 = vmatpush1.xpose.msra.mxu0 0.0
        %1220 = vmatprep.mubr.f32.mxu0 0.0
        %1221 = vmatmul.mubr.f32.gmra.mrb[0].mxu0 %v1148
        %v1222 = vpop.f32.mrb[0].mxu0
        %v1223 = vadd.f32 0.0, %v1222
        %v1224 = vpop.f32.mrb[0].mxu0
        %1225 = vmatprep.mubr.f32.mxu0 0.0
        %1226 = vmatmul.mubr.f32.gmra.mrb[0].mxu0 %v1150
        %v1227 = vpop.f32.mrb[0].mxu0
        %v1228 = vadd.f32 0.0, %v1227
        %v1229 = vpop.f32.mrb[0].mxu0
        %1230 = vdwg.mxu0
        %v1231 = vsel %vm430, %v1223, -inf
        %1232 = vmax.xlane.f32.xlu0 %v1231
        %v1233 = vpop.xlane.xlu0 %1232
        %v1234 = vsel %vm430, %v1228, -inf
        %1235 = vmax.xlane.f32.xlu0 %v1234
        %v1236 = vpop.xlane.xlu0 %1235
        %v1237 = vsub.f32 %v1223, %v1233
        %v1238 = vsub.f32 %v1228, %v1236
        %v1239 = vmul.f32 %v1237, 1.442695
        %v1240 = vpow.pop %v1239
        %v1241 = vmul.f32 %v1238, 1.442695
        %v1242 = vpow.pop %v1241
        %v1243 = vsel %vm430, %v1240, 0.0
        %1244 = vadd.xlane.f32.xlu0 %v1243
        %v1245 = vpop.xlane.xlu0 %1244
        %v1246 = vsel %vm430, %v1242, 0.0
        %1247 = vadd.xlane.f32.xlu0 %v1246
        %v1248 = vpop.xlane.xlu0 %1247
        %v1249 = vrcp.pop %v1245
        %v1250 = vrcp.pop %v1248
        %v1251 = vmul.f32 %v1240, %v1249
        %v1252 = vmul.f32 %v1242, %v1250
        %1253 = vrot.lane.b32.xlu0 %v338, 48
        %v1254 = vpop.permute.xlu0 %1253
        %1255 = vrot.lane.b32.xlu0 %v339, 48
        %v1256 = vpop.permute.xlu0 %1255
        %v1260 = vsel %vm430, %v1251, 0
        %v1263 = vsel %vm430, %v1252, 0
        %1265 = vmatprep.subr.mxu0 0.0
        %1266 = vmatpush1.msra.mxu0 %v1254
        %1267 = vmatprep.subr.mxu0 0.0
        %1268 = vmatpush1.msra.mxu0 %v1256
        %1269 = vmatprep.subr.mxu0 0.0
        %1270 = vmatpush1.msra.mxu0 0.0
        %1271 = vmatprep.subr.mxu0 0.0
        %1272 = vmatpush1.msra.mxu0 0.0
        %1273 = vmatprep.subr.mxu0 0.0
        %1274 = vmatpush1.msra.mxu0 0.0
        %1275 = vmatprep.subr.mxu0 0.0
        %1276 = vmatpush1.msra.mxu0 0.0
        %1277 = vmatprep.subr.mxu0 0.0
        %1278 = vmatpush1.msra.mxu0 0.0
        %1279 = vmatprep.subr.mxu0 0.0
        %1280 = vmatpush1.msra.mxu0 0.0
        %1281 = vmatprep.subr.mxu0 0.0
        %1282 = vmatpush1.msra.mxu0 0.0
        %1283 = vmatprep.subr.mxu0 0.0
        %1284 = vmatpush1.msra.mxu0 0.0
        %1285 = vmatprep.subr.mxu0 0.0
        %1286 = vmatpush1.msra.mxu0 0.0
        %1287 = vmatprep.subr.mxu0 0.0
        %1288 = vmatpush1.msra.mxu0 0.0
        %1289 = vmatprep.subr.mxu0 0.0
        %1290 = vmatpush1.msra.mxu0 0.0
        %1291 = vmatprep.subr.mxu0 0.0
        %1292 = vmatpush1.msra.mxu0 0.0
        %1293 = vmatprep.subr.mxu0 0.0
        %1294 = vmatpush1.msra.mxu0 0.0
        %1295 = vmatprep.subr.mxu0 0.0
        %1296 = vmatpush1.msra.mxu0 0.0
        %1297 = vmatprep.subr.mxu0 0.0
        %1298 = vmatpush1.msra.mxu0 0.0
        %1299 = vmatprep.subr.mxu0 0.0
        %1300 = vmatpush1.msra.mxu0 0.0
        %1301 = vmatprep.subr.mxu0 0.0
        %1302 = vmatpush1.msra.mxu0 0.0
        %1303 = vmatprep.subr.mxu0 0.0
        %1304 = vmatpush1.msra.mxu0 0.0
        %1305 = vmatprep.subr.mxu0 0.0
        %1306 = vmatpush1.msra.mxu0 0.0
        %1307 = vmatprep.subr.mxu0 0.0
        %1308 = vmatpush1.msra.mxu0 0.0
        %1309 = vmatprep.subr.mxu0 0.0
        %1310 = vmatpush1.msra.mxu0 0.0
        %1311 = vmatprep.subr.mxu0 0.0
        %1312 = vmatpush1.msra.mxu0 0.0
        %1313 = vmatprep.subr.mxu0 0.0
        %1314 = vmatpush1.msra.mxu0 0.0
        %1315 = vmatprep.subr.mxu0 0.0
        %1316 = vmatpush1.msra.mxu0 0.0
        %1317 = vmatprep.subr.mxu0 0.0
        %1318 = vmatpush1.msra.mxu0 0.0
        %1319 = vmatprep.subr.mxu0 0.0
        %1320 = vmatpush1.msra.mxu0 0.0
        %1321 = vmatprep.subr.mxu0 0.0
        %1322 = vmatpush1.msra.mxu0 0.0
        %1323 = vmatprep.subr.mxu0 0.0
        %1324 = vmatpush1.msra.mxu0 0.0
        %1325 = vmatprep.subr.mxu0 0.0
        %1326 = vmatpush1.msra.mxu0 0.0
        %1327 = vmatprep.subr.mxu0 0.0
        %1328 = vmatpush1.msra.mxu0 0.0
        %1329 = vmatprep.mubr.f32.mxu0 0.0
        %1330 = vmatmul.mubr.f32.gmra.mrb[0].mxu0 %v1260
        %v1331 = vpop.f32.mrb[0].mxu0
        %v1332 = vadd.f32 0.0, %v1331
        %v1333 = vpop.f32.mrb[0].mxu0
        %1334 = vmatprep.mubr.f32.mxu0 0.0
        %1335 = vmatmul.mubr.f32.gmra.mrb[0].mxu0 %v1263
        %v1336 = vpop.f32.mrb[0].mxu0
        %v1337 = vadd.f32 0.0, %v1336
        %v1338 = vpop.f32.mrb[0].mxu0
        %1339 = vdwg.mxu0
        %1340 = vrot.lane.b32.xlu0 %v338, 108
        %v1341 = vpop.permute.xlu0 %1340
        %1342 = vrot.lane.b32.xlu0 %v339, 108
        %v1343 = vpop.permute.xlu0 %1342
        %1344 = vrot.lane.b32.xlu0 %v338, 76
        %v1345 = vpop.permute.xlu0 %1344
        %1346 = vrot.lane.b32.xlu0 %v339, 76
        %v1347 = vpop.permute.xlu0 %1346
        %v1348 = vsel %vm346, %v1341, 0
        %v1350 = vsel %vm346, %v1343, 0
        %v1352 = vsel %vm346, %v1345, 0
        %v1354 = vsel %vm346, %v1347, 0
        %1356 = vmatprep.subr.mxu0 0.0
        %1357 = vmatpush1.xpose.msra.mxu0 %v1352
        %1358 = vmatprep.subr.mxu0 0.0
        %1359 = vmatpush1.xpose.msra.mxu0 %v1354
        %1360 = vmatprep.subr.mxu0 0.0
        %1361 = vmatpush1.xpose.msra.mxu0 0.0
        %1362 = vmatprep.subr.mxu0 0.0
        %1363 = vmatpush1.xpose.msra.mxu0 0.0
        %1364 = vmatprep.subr.mxu0 0.0
        %1365 = vmatpush1.xpose.msra.mxu0 0.0
        %1366 = vmatprep.subr.mxu0 0.0
        %1367 = vmatpush1.xpose.msra.mxu0 0.0
        %1368 = vmatprep.subr.mxu0 0.0
        %1369 = vmatpush1.xpose.msra.mxu0 0.0
        %1370 = vmatprep.subr.mxu0 0.0
        %1371 = vmatpush1.xpose.msra.mxu0 0.0
        %1372 = vmatprep.subr.mxu0 0.0
        %1373 = vmatpush1.xpose.msra.mxu0 0.0
        %1374 = vmatprep.subr.mxu0 0.0
        %1375 = vmatpush1.xpose.msra.mxu0 0.0
        %1376 = vmatprep.subr.mxu0 0.0
        %1377 = vmatpush1.xpose.msra.mxu0 0.0
        %1378 = vmatprep.subr.mxu0 0.0
        %1379 = vmatpush1.xpose.msra.mxu0 0.0
        %1380 = vmatprep.subr.mxu0 0.0
        %1381 = vmatpush1.xpose.msra.mxu0 0.0
        %1382 = vmatprep.subr.mxu0 0.0
        %1383 = vmatpush1.xpose.msra.mxu0 0.0
        %1384 = vmatprep.subr.mxu0 0.0
        %1385 = vmatpush1.xpose.msra.mxu0 0.0
        %1386 = vmatprep.subr.mxu0 0.0
        %1387 = vmatpush1.xpose.msra.mxu0 0.0
        %1388 = vmatprep.subr.mxu0 0.0
        %1389 = vmatpush1.xpose.msra.mxu0 0.0
        %1390 = vmatprep.subr.mxu0 0.0
        %1391 = vmatpush1.xpose.msra.mxu0 0.0
        %1392 = vmatprep.subr.mxu0 0.0
        %1393 = vmatpush1.xpose.msra.mxu0 0.0
        %1394 = vmatprep.subr.mxu0 0.0
        %1395 = vmatpush1.xpose.msra.mxu0 0.0
        %1396 = vmatprep.subr.mxu0 0.0
        %1397 = vmatpush1.xpose.msra.mxu0 0.0
        %1398 = vmatprep.subr.mxu0 0.0
        %1399 = vmatpush1.xpose.msra.mxu0 0.0
        %1400 = vmatprep.subr.mxu0 0.0
        %1401 = vmatpush1.xpose.msra.mxu0 0.0
        %1402 = vmatprep.subr.mxu0 0.0
        %1403 = vmatpush1.xpose.msra.mxu0 0.0
        %1404 = vmatprep.subr.mxu0 0.0
        %1405 = vmatpush1.xpose.msra.mxu0 0.0
        %1406 = vmatprep.subr.mxu0 0.0
        %1407 = vmatpush1.xpose.msra.mxu0 0.0
        %1408 = vmatprep.subr.mxu0 0.0
        %1409 = vmatpush1.xpose.msra.mxu0 0.0
        %1410 = vmatprep.subr.mxu0 0.0
        %1411 = vmatpush1.xpose.msra.mxu0 0.0
        %1412 = vmatprep.subr.mxu0 0.0
        %1413 = vmatpush1.xpose.msra.mxu0 0.0
        %1414 = vmatprep.subr.mxu0 0.0
        %1415 = vmatpush1.xpose.msra.mxu0 0.0
        %1416 = vmatprep.subr.mxu0 0.0
        %1417 = vmatpush1.xpose.msra.mxu0 0.0
        %1418 = vmatprep.subr.mxu0 0.0
        %1419 = vmatpush1.xpose.msra.mxu0 0.0
        %1420 = vmatprep.mubr.f32.mxu0 0.0
        %1421 = vmatmul.mubr.f32.gmra.mrb[0].mxu0 %v1348
        %v1422 = vpop.f32.mrb[0].mxu0
        %v1423 = vadd.f32 0.0, %v1422
        %v1424 = vpop.f32.mrb[0].mxu0
        %1425 = vmatprep.mubr.f32.mxu0 0.0
        %1426 = vmatmul.mubr.f32.gmra.mrb[0].mxu0 %v1350
        %v1427 = vpop.f32.mrb[0].mxu0
        %v1428 = vadd.f32 0.0, %v1427
        %v1429 = vpop.f32.mrb[0].mxu0
        %1430 = vdwg.mxu0
        %v1431 = vsel %vm430, %v1423, -inf
        %1432 = vmax.xlane.f32.xlu0 %v1431
        %v1433 = vpop.xlane.xlu0 %1432
        %v1434 = vsel %vm430, %v1428, -inf
        %1435 = vmax.xlane.f32.xlu0 %v1434
        %v1436 = vpop.xlane.xlu0 %1435
        %v1437 = vsub.f32 %v1423, %v1433
        %v1438 = vsub.f32 %v1428, %v1436
        %v1439 = vmul.f32 %v1437, 1.442695
        %v1440 = vpow.pop %v1439
        %v1441 = vmul.f32 %v1438, 1.442695
        %v1442 = vpow.pop %v1441
        %v1443 = vsel %vm430, %v1440, 0.0
        %1444 = vadd.xlane.f32.xlu0 %v1443
        %v1445 = vpop.xlane.xlu0 %1444
        %v1446 = vsel %vm430, %v1442, 0.0
        %1447 = vadd.xlane.f32.xlu0 %v1446
        %v1448 = vpop.xlane.xlu0 %1447
        %v1449 = vrcp.pop %v1445
        %v1450 = vrcp.pop %v1448
        %v1451 = vmul.f32 %v1440, %v1449
        %v1452 = vmul.f32 %v1442, %v1450
        %1453 = vrot.lane.b32.xlu0 %v338, 44
        %v1454 = vpop.permute.xlu0 %1453
        %1455 = vrot.lane.b32.xlu0 %v339, 44
        %v1456 = vpop.permute.xlu0 %1455
        %v1460 = vsel %vm430, %v1451, 0
        %v1463 = vsel %vm430, %v1452, 0
        %1465 = vmatprep.subr.mxu0 0.0
        %1466 = vmatpush1.msra.mxu0 %v1454
        %1467 = vmatprep.subr.mxu0 0.0
        %1468 = vmatpush1.msra.mxu0 %v1456
        %1469 = vmatprep.subr.mxu0 0.0
        %1470 = vmatpush1.msra.mxu0 0.0
        %1471 = vmatprep.subr.mxu0 0.0
        %1472 = vmatpush1.msra.mxu0 0.0
        %1473 = vmatprep.subr.mxu0 0.0
        %1474 = vmatpush1.msra.mxu0 0.0
        %1475 = vmatprep.subr.mxu0 0.0
        %1476 = vmatpush1.msra.mxu0 0.0
        %1477 = vmatprep.subr.mxu0 0.0
        %1478 = vmatpush1.msra.mxu0 0.0
        %1479 = vmatprep.subr.mxu0 0.0
        %1480 = vmatpush1.msra.mxu0 0.0
        %1481 = vmatprep.subr.mxu0 0.0
        %1482 = vmatpush1.msra.mxu0 0.0
        %1483 = vmatprep.subr.mxu0 0.0
        %1484 = vmatpush1.msra.mxu0 0.0
        %1485 = vmatprep.subr.mxu0 0.0
        %1486 = vmatpush1.msra.mxu0 0.0
        %1487 = vmatprep.subr.mxu0 0.0
        %1488 = vmatpush1.msra.mxu0 0.0
        %1489 = vmatprep.subr.mxu0 0.0
        %1490 = vmatpush1.msra.mxu0 0.0
        %1491 = vmatprep.subr.mxu0 0.0
        %1492 = vmatpush1.msra.mxu0 0.0
        %1493 = vmatprep.subr.mxu0 0.0
        %1494 = vmatpush1.msra.mxu0 0.0
        %1495 = vmatprep.subr.mxu0 0.0
        %1496 = vmatpush1.msra.mxu0 0.0
        %1497 = vmatprep.subr.mxu0 0.0
        %1498 = vmatpush1.msra.mxu0 0.0
        %1499 = vmatprep.subr.mxu0 0.0
        %1500 = vmatpush1.msra.mxu0 0.0
        %1501 = vmatprep.subr.mxu0 0.0
        %1502 = vmatpush1.msra.mxu0 0.0
        %1503 = vmatprep.subr.mxu0 0.0
        %1504 = vmatpush1.msra.mxu0 0.0
        %1505 = vmatprep.subr.mxu0 0.0
        %1506 = vmatpush1.msra.mxu0 0.0
        %1507 = vmatprep.subr.mxu0 0.0
        %1508 = vmatpush1.msra.mxu0 0.0
        %1509 = vmatprep.subr.mxu0 0.0
        %1510 = vmatpush1.msra.mxu0 0.0
        %1511 = vmatprep.subr.mxu0 0.0
        %1512 = vmatpush1.msra.mxu0 0.0
        %1513 = vmatprep.subr.mxu0 0.0
        %1514 = vmatpush1.msra.mxu0 0.0
        %1515 = vmatprep.subr.mxu0 0.0
        %1516 = vmatpush1.msra.mxu0 0.0
        %1517 = vmatprep.subr.mxu0 0.0
        %1518 = vmatpush1.msra.mxu0 0.0
        %1519 = vmatprep.subr.mxu0 0.0
        %1520 = vmatpush1.msra.mxu0 0.0
        %1521 = vmatprep.subr.mxu0 0.0
        %1522 = vmatpush1.msra.mxu0 0.0
        %1523 = vmatprep.subr.mxu0 0.0
        %1524 = vmatpush1.msra.mxu0 0.0
        %1525 = vmatprep.subr.mxu0 0.0
        %1526 = vmatpush1.msra.mxu0 0.0
        %1527 = vmatprep.subr.mxu0 0.0
        %1528 = vmatpush1.msra.mxu0 0.0
        %1529 = vmatprep.mubr.f32.mxu0 0.0
        %1530 = vmatmul.mubr.f32.gmra.mrb[0].mxu0 %v1460
        %v1531 = vpop.f32.mrb[0].mxu0
        %v1532 = vadd.f32 0.0, %v1531
        %v1533 = vpop.f32.mrb[0].mxu0
        %1534 = vmatprep.mubr.f32.mxu0 0.0
        %1535 = vmatmul.mubr.f32.gmra.mrb[0].mxu0 %v1463
        %v1536 = vpop.f32.mrb[0].mxu0
        %v1537 = vadd.f32 0.0, %v1536
        %v1538 = vpop.f32.mrb[0].mxu0
        %1539 = vdwg.mxu0
        %1540 = vrot.lane.b32.xlu0 %v338, 104
        %v1541 = vpop.permute.xlu0 %1540
        %1542 = vrot.lane.b32.xlu0 %v339, 104
        %v1543 = vpop.permute.xlu0 %1542
        %1544 = vrot.lane.b32.xlu0 %v338, 72
        %v1545 = vpop.permute.xlu0 %1544
        %1546 = vrot.lane.b32.xlu0 %v339, 72
        %v1547 = vpop.permute.xlu0 %1546
        %v1548 = vsel %vm346, %v1541, 0
        %v1550 = vsel %vm346, %v1543, 0
        %v1552 = vsel %vm346, %v1545, 0
        %v1554 = vsel %vm346, %v1547, 0
        %1556 = vmatprep.subr.mxu0 0.0
        %1557 = vmatpush1.xpose.msra.mxu0 %v1552
        %1558 = vmatprep.subr.mxu0 0.0
        %1559 = vmatpush1.xpose.msra.mxu0 %v1554
        %1560 = vmatprep.subr.mxu0 0.0
        %1561 = vmatpush1.xpose.msra.mxu0 0.0
        %1562 = vmatprep.subr.mxu0 0.0
        %1563 = vmatpush1.xpose.msra.mxu0 0.0
        %1564 = vmatprep.subr.mxu0 0.0
        %1565 = vmatpush1.xpose.msra.mxu0 0.0
        %1566 = vmatprep.subr.mxu0 0.0
        %1567 = vmatpush1.xpose.msra.mxu0 0.0
        %1568 = vmatprep.subr.mxu0 0.0
        %1569 = vmatpush1.xpose.msra.mxu0 0.0
        %1570 = vmatprep.subr.mxu0 0.0
        %1571 = vmatpush1.xpose.msra.mxu0 0.0
        %1572 = vmatprep.subr.mxu0 0.0
        %1573 = vmatpush1.xpose.msra.mxu0 0.0
        %1574 = vmatprep.subr.mxu0 0.0
        %1575 = vmatpush1.xpose.msra.mxu0 0.0
        %1576 = vmatprep.subr.mxu0 0.0
        %1577 = vmatpush1.xpose.msra.mxu0 0.0
        %1578 = vmatprep.subr.mxu0 0.0
        %1579 = vmatpush1.xpose.msra.mxu0 0.0
        %1580 = vmatprep.subr.mxu0 0.0
        %1581 = vmatpush1.xpose.msra.mxu0 0.0
        %1582 = vmatprep.subr.mxu0 0.0
        %1583 = vmatpush1.xpose.msra.mxu0 0.0
        %1584 = vmatprep.subr.mxu0 0.0
        %1585 = vmatpush1.xpose.msra.mxu0 0.0
        %1586 = vmatprep.subr.mxu0 0.0
        %1587 = vmatpush1.xpose.msra.mxu0 0.0
        %1588 = vmatprep.subr.mxu0 0.0
        %1589 = vmatpush1.xpose.msra.mxu0 0.0
        %1590 = vmatprep.subr.mxu0 0.0
        %1591 = vmatpush1.xpose.msra.mxu0 0.0
        %1592 = vmatprep.subr.mxu0 0.0
        %1593 = vmatpush1.xpose.msra.mxu0 0.0
        %1594 = vmatprep.subr.mxu0 0.0
        %1595 = vmatpush1.xpose.msra.mxu0 0.0
        %1596 = vmatprep.subr.mxu0 0.0
        %1597 = vmatpush1.xpose.msra.mxu0 0.0
        %1598 = vmatprep.subr.mxu0 0.0
        %1599 = vmatpush1.xpose.msra.mxu0 0.0
        %1600 = vmatprep.subr.mxu0 0.0
        %1601 = vmatpush1.xpose.msra.mxu0 0.0
        %1602 = vmatprep.subr.mxu0 0.0
        %1603 = vmatpush1.xpose.msra.mxu0 0.0
        %1604 = vmatprep.subr.mxu0 0.0
        %1605 = vmatpush1.xpose.msra.mxu0 0.0
        %1606 = vmatprep.subr.mxu0 0.0
        %1607 = vmatpush1.xpose.msra.mxu0 0.0
        %1608 = vmatprep.subr.mxu0 0.0
        %1609 = vmatpush1.xpose.msra.mxu0 0.0
        %1610 = vmatprep.subr.mxu0 0.0
        %1611 = vmatpush1.xpose.msra.mxu0 0.0
        %1612 = vmatprep.subr.mxu0 0.0
        %1613 = vmatpush1.xpose.msra.mxu0 0.0
        %1614 = vmatprep.subr.mxu0 0.0
        %1615 = vmatpush1.xpose.msra.mxu0 0.0
        %1616 = vmatprep.subr.mxu0 0.0
        %1617 = vmatpush1.xpose.msra.mxu0 0.0
        %1618 = vmatprep.subr.mxu0 0.0
        %1619 = vmatpush1.xpose.msra.mxu0 0.0
        %1620 = vmatprep.mubr.f32.mxu0 0.0
        %1621 = vmatmul.mubr.f32.gmra.mrb[0].mxu0 %v1548
        %v1622 = vpop.f32.mrb[0].mxu0
        %v1623 = vadd.f32 0.0, %v1622
        %v1624 = vpop.f32.mrb[0].mxu0
        %1625 = vmatprep.mubr.f32.mxu0 0.0
        %1626 = vmatmul.mubr.f32.gmra.mrb[0].mxu0 %v1550
        %v1627 = vpop.f32.mrb[0].mxu0
        %v1628 = vadd.f32 0.0, %v1627
        %v1629 = vpop.f32.mrb[0].mxu0
        %1630 = vdwg.mxu0
        %v1631 = vsel %vm430, %v1623, -inf
        %1632 = vmax.xlane.f32.xlu0 %v1631
        %v1633 = vpop.xlane.xlu0 %1632
        %v1634 = vsel %vm430, %v1628, -inf
        %1635 = vmax.xlane.f32.xlu0 %v1634
        %v1636 = vpop.xlane.xlu0 %1635
        %v1637 = vsub.f32 %v1623, %v1633
        %v1638 = vsub.f32 %v1628, %v1636
        %v1639 = vmul.f32 %v1637, 1.442695
        %v1640 = vpow.pop %v1639
        %v1641 = vmul.f32 %v1638, 1.442695
        %v1642 = vpow.pop %v1641
        %v1643 = vsel %vm430, %v1640, 0.0
        %1644 = vadd.xlane.f32.xlu0 %v1643
        %v1645 = vpop.xlane.xlu0 %1644
        %v1646 = vsel %vm430, %v1642, 0.0
        %1647 = vadd.xlane.f32.xlu0 %v1646
        %v1648 = vpop.xlane.xlu0 %1647
        %v1649 = vrcp.pop %v1645
        %v1650 = vrcp.pop %v1648
        %v1651 = vmul.f32 %v1640, %v1649
        %v1652 = vmul.f32 %v1642, %v1650
        %1653 = vrot.lane.b32.xlu0 %v338, 40
        %v1654 = vpop.permute.xlu0 %1653
        %1655 = vrot.lane.b32.xlu0 %v339, 40
        %v1656 = vpop.permute.xlu0 %1655
        %v1660 = vsel %vm430, %v1651, 0
        %v1663 = vsel %vm430, %v1652, 0
        %1665 = vmatprep.subr.mxu0 0.0
        %1666 = vmatpush1.msra.mxu0 %v1654
        %1667 = vmatprep.subr.mxu0 0.0
        %1668 = vmatpush1.msra.mxu0 %v1656
        %1669 = vmatprep.subr.mxu0 0.0
        %1670 = vmatpush1.msra.mxu0 0.0
        %1671 = vmatprep.subr.mxu0 0.0
        %1672 = vmatpush1.msra.mxu0 0.0
        %1673 = vmatprep.subr.mxu0 0.0
        %1674 = vmatpush1.msra.mxu0 0.0
        %1675 = vmatprep.subr.mxu0 0.0
        %1676 = vmatpush1.msra.mxu0 0.0
        %1677 = vmatprep.subr.mxu0 0.0
        %1678 = vmatpush1.msra.mxu0 0.0
        %1679 = vmatprep.subr.mxu0 0.0
        %1680 = vmatpush1.msra.mxu0 0.0
        %1681 = vmatprep.subr.mxu0 0.0
        %1682 = vmatpush1.msra.mxu0 0.0
        %1683 = vmatprep.subr.mxu0 0.0
        %1684 = vmatpush1.msra.mxu0 0.0
        %1685 = vmatprep.subr.mxu0 0.0
        %1686 = vmatpush1.msra.mxu0 0.0
        %1687 = vmatprep.subr.mxu0 0.0
        %1688 = vmatpush1.msra.mxu0 0.0
        %1689 = vmatprep.subr.mxu0 0.0
        %1690 = vmatpush1.msra.mxu0 0.0
        %1691 = vmatprep.subr.mxu0 0.0
        %1692 = vmatpush1.msra.mxu0 0.0
        %1693 = vmatprep.subr.mxu0 0.0
        %1694 = vmatpush1.msra.mxu0 0.0
        %1695 = vmatprep.subr.mxu0 0.0
        %1696 = vmatpush1.msra.mxu0 0.0
        %1697 = vmatprep.subr.mxu0 0.0
        %1698 = vmatpush1.msra.mxu0 0.0
        %1699 = vmatprep.subr.mxu0 0.0
        %1700 = vmatpush1.msra.mxu0 0.0
        %1701 = vmatprep.subr.mxu0 0.0
        %1702 = vmatpush1.msra.mxu0 0.0
        %1703 = vmatprep.subr.mxu0 0.0
        %1704 = vmatpush1.msra.mxu0 0.0
        %1705 = vmatprep.subr.mxu0 0.0
        %1706 = vmatpush1.msra.mxu0 0.0
        %1707 = vmatprep.subr.mxu0 0.0
        %1708 = vmatpush1.msra.mxu0 0.0
        %1709 = vmatprep.subr.mxu0 0.0
        %1710 = vmatpush1.msra.mxu0 0.0
        %1711 = vmatprep.subr.mxu0 0.0
        %1712 = vmatpush1.msra.mxu0 0.0
        %1713 = vmatprep.subr.mxu0 0.0
        %1714 = vmatpush1.msra.mxu0 0.0
        %1715 = vmatprep.subr.mxu0 0.0
        %1716 = vmatpush1.msra.mxu0 0.0
        %1717 = vmatprep.subr.mxu0 0.0
        %1718 = vmatpush1.msra.mxu0 0.0
        %1719 = vmatprep.subr.mxu0 0.0
        %1720 = vmatpush1.msra.mxu0 0.0
        %1721 = vmatprep.subr.mxu0 0.0
        %1722 = vmatpush1.msra.mxu0 0.0
        %1723 = vmatprep.subr.mxu0 0.0
        %1724 = vmatpush1.msra.mxu0 0.0
        %1725 = vmatprep.subr.mxu0 0.0
        %1726 = vmatpush1.msra.mxu0 0.0
        %1727 = vmatprep.subr.mxu0 0.0
        %1728 = vmatpush1.msra.mxu0 0.0
        %1729 = vmatprep.mubr.f32.mxu0 0.0
        %1730 = vmatmul.mubr.f32.gmra.mrb[0].mxu0 %v1660
        %v1731 = vpop.f32.mrb[0].mxu0
        %v1732 = vadd.f32 0.0, %v1731
        %v1733 = vpop.f32.mrb[0].mxu0
        %1734 = vmatprep.mubr.f32.mxu0 0.0
        %1735 = vmatmul.mubr.f32.gmra.mrb[0].mxu0 %v1663
        %v1736 = vpop.f32.mrb[0].mxu0
        %v1737 = vadd.f32 0.0, %v1736
        %v1738 = vpop.f32.mrb[0].mxu0
        %1739 = vdwg.mxu0
        %1740 = vrot.lane.b32.xlu0 %v338, 100
        %v1741 = vpop.permute.xlu0 %1740
        %1742 = vrot.lane.b32.xlu0 %v339, 100
        %v1743 = vpop.permute.xlu0 %1742
        %1744 = vrot.lane.b32.xlu0 %v338, 68
        %v1745 = vpop.permute.xlu0 %1744
        %1746 = vrot.lane.b32.xlu0 %v339, 68
        %v1747 = vpop.permute.xlu0 %1746
        %v1748 = vsel %vm346, %v1741, 0
        %v1750 = vsel %vm346, %v1743, 0
        %v1752 = vsel %vm346, %v1745, 0
        %v1754 = vsel %vm346, %v1747, 0
        %1756 = vmatprep.subr.mxu0 0.0
        %1757 = vmatpush1.xpose.msra.mxu0 %v1752
        %1758 = vmatprep.subr.mxu0 0.0
        %1759 = vmatpush1.xpose.msra.mxu0 %v1754
        %1760 = vmatprep.subr.mxu0 0.0
        %1761 = vmatpush1.xpose.msra.mxu0 0.0
        %1762 = vmatprep.subr.mxu0 0.0
        %1763 = vmatpush1.xpose.msra.mxu0 0.0
        %1764 = vmatprep.subr.mxu0 0.0
        %1765 = vmatpush1.xpose.msra.mxu0 0.0
        %1766 = vmatprep.subr.mxu0 0.0
        %1767 = vmatpush1.xpose.msra.mxu0 0.0
        %1768 = vmatprep.subr.mxu0 0.0
        %1769 = vmatpush1.xpose.msra.mxu0 0.0
        %1770 = vmatprep.subr.mxu0 0.0
        %1771 = vmatpush1.xpose.msra.mxu0 0.0
        %1772 = vmatprep.subr.mxu0 0.0
        %1773 = vmatpush1.xpose.msra.mxu0 0.0
        %1774 = vmatprep.subr.mxu0 0.0
        %1775 = vmatpush1.xpose.msra.mxu0 0.0
        %1776 = vmatprep.subr.mxu0 0.0
        %1777 = vmatpush1.xpose.msra.mxu0 0.0
        %1778 = vmatprep.subr.mxu0 0.0
        %1779 = vmatpush1.xpose.msra.mxu0 0.0
        %1780 = vmatprep.subr.mxu0 0.0
        %1781 = vmatpush1.xpose.msra.mxu0 0.0
        %1782 = vmatprep.subr.mxu0 0.0
        %1783 = vmatpush1.xpose.msra.mxu0 0.0
        %1784 = vmatprep.subr.mxu0 0.0
        %1785 = vmatpush1.xpose.msra.mxu0 0.0
        %1786 = vmatprep.subr.mxu0 0.0
        %1787 = vmatpush1.xpose.msra.mxu0 0.0
        %1788 = vmatprep.subr.mxu0 0.0
        %1789 = vmatpush1.xpose.msra.mxu0 0.0
        %1790 = vmatprep.subr.mxu0 0.0
        %1791 = vmatpush1.xpose.msra.mxu0 0.0
        %1792 = vmatprep.subr.mxu0 0.0
        %1793 = vmatpush1.xpose.msra.mxu0 0.0
        %1794 = vmatprep.subr.mxu0 0.0
        %1795 = vmatpush1.xpose.msra.mxu0 0.0
        %1796 = vmatprep.subr.mxu0 0.0
        %1797 = vmatpush1.xpose.msra.mxu0 0.0
        %1798 = vmatprep.subr.mxu0 0.0
        %1799 = vmatpush1.xpose.msra.mxu0 0.0
        %1800 = vmatprep.subr.mxu0 0.0
        %1801 = vmatpush1.xpose.msra.mxu0 0.0
        %1802 = vmatprep.subr.mxu0 0.0
        %1803 = vmatpush1.xpose.msra.mxu0 0.0
        %1804 = vmatprep.subr.mxu0 0.0
        %1805 = vmatpush1.xpose.msra.mxu0 0.0
        %1806 = vmatprep.subr.mxu0 0.0
        %1807 = vmatpush1.xpose.msra.mxu0 0.0
        %1808 = vmatprep.subr.mxu0 0.0
        %1809 = vmatpush1.xpose.msra.mxu0 0.0
        %1810 = vmatprep.subr.mxu0 0.0
        %1811 = vmatpush1.xpose.msra.mxu0 0.0
        %1812 = vmatprep.subr.mxu0 0.0
        %1813 = vmatpush1.xpose.msra.mxu0 0.0
        %1814 = vmatprep.subr.mxu0 0.0
        %1815 = vmatpush1.xpose.msra.mxu0 0.0
        %1816 = vmatprep.subr.mxu0 0.0
        %1817 = vmatpush1.xpose.msra.mxu0 0.0
        %1818 = vmatprep.subr.mxu0 0.0
        %1819 = vmatpush1.xpose.msra.mxu0 0.0
        %1820 = vmatprep.mubr.f32.mxu0 0.0
        %1821 = vmatmul.mubr.f32.gmra.mrb[0].mxu0 %v1748
        %v1822 = vpop.f32.mrb[0].mxu0
        %v1823 = vadd.f32 0.0, %v1822
        %v1824 = vpop.f32.mrb[0].mxu0
        %1825 = vmatprep.mubr.f32.mxu0 0.0
        %1826 = vmatmul.mubr.f32.gmra.mrb[0].mxu0 %v1750
        %v1827 = vpop.f32.mrb[0].mxu0
        %v1828 = vadd.f32 0.0, %v1827
        %v1829 = vpop.f32.mrb[0].mxu0
        %1830 = vdwg.mxu0
        %v1831 = vsel %vm430, %v1823, -inf
        %1832 = vmax.xlane.f32.xlu0 %v1831
        %v1833 = vpop.xlane.xlu0 %1832
        %v1834 = vsel %vm430, %v1828, -inf
        %1835 = vmax.xlane.f32.xlu0 %v1834
        %v1836 = vpop.xlane.xlu0 %1835
        %v1837 = vsub.f32 %v1823, %v1833
        %v1838 = vsub.f32 %v1828, %v1836
        %v1839 = vmul.f32 %v1837, 1.442695
        %v1840 = vpow.pop %v1839
        %v1841 = vmul.f32 %v1838, 1.442695
        %v1842 = vpow.pop %v1841
        %v1843 = vsel %vm430, %v1840, 0.0
        %1844 = vadd.xlane.f32.xlu0 %v1843
        %v1845 = vpop.xlane.xlu0 %1844
        %v1846 = vsel %vm430, %v1842, 0.0
        %1847 = vadd.xlane.f32.xlu0 %v1846
        %v1848 = vpop.xlane.xlu0 %1847
        %v1849 = vrcp.pop %v1845
        %v1850 = vrcp.pop %v1848
        %v1851 = vmul.f32 %v1840, %v1849
        %v1852 = vmul.f32 %v1842, %v1850
        %1853 = vrot.lane.b32.xlu0 %v338, 36
        %v1854 = vpop.permute.xlu0 %1853
        %1855 = vrot.lane.b32.xlu0 %v339, 36
        %v1856 = vpop.permute.xlu0 %1855
        %v1860 = vsel %vm430, %v1851, 0
        %v1863 = vsel %vm430, %v1852, 0
        %1865 = vmatprep.subr.mxu0 0.0
        %1866 = vmatpush1.msra.mxu0 %v1854
        %1867 = vmatprep.subr.mxu0 0.0
        %1868 = vmatpush1.msra.mxu0 %v1856
        %1869 = vmatprep.subr.mxu0 0.0
        %1870 = vmatpush1.msra.mxu0 0.0
        %1871 = vmatprep.subr.mxu0 0.0
        %1872 = vmatpush1.msra.mxu0 0.0
        %1873 = vmatprep.subr.mxu0 0.0
        %1874 = vmatpush1.msra.mxu0 0.0
        %1875 = vmatprep.subr.mxu0 0.0
        %1876 = vmatpush1.msra.mxu0 0.0
        %1877 = vmatprep.subr.mxu0 0.0
        %1878 = vmatpush1.msra.mxu0 0.0
        %1879 = vmatprep.subr.mxu0 0.0
        %1880 = vmatpush1.msra.mxu0 0.0
        %1881 = vmatprep.subr.mxu0 0.0
        %1882 = vmatpush1.msra.mxu0 0.0
        %1883 = vmatprep.subr.mxu0 0.0
        %1884 = vmatpush1.msra.mxu0 0.0
        %1885 = vmatprep.subr.mxu0 0.0
        %1886 = vmatpush1.msra.mxu0 0.0
        %1887 = vmatprep.subr.mxu0 0.0
        %1888 = vmatpush1.msra.mxu0 0.0
        %1889 = vmatprep.subr.mxu0 0.0
        %1890 = vmatpush1.msra.mxu0 0.0
        %1891 = vmatprep.subr.mxu0 0.0
        %1892 = vmatpush1.msra.mxu0 0.0
        %1893 = vmatprep.subr.mxu0 0.0
        %1894 = vmatpush1.msra.mxu0 0.0
        %1895 = vmatprep.subr.mxu0 0.0
        %1896 = vmatpush1.msra.mxu0 0.0
        %1897 = vmatprep.subr.mxu0 0.0
        %1898 = vmatpush1.msra.mxu0 0.0
        %1899 = vmatprep.subr.mxu0 0.0
        %1900 = vmatpush1.msra.mxu0 0.0
        %1901 = vmatprep.subr.mxu0 0.0
        %1902 = vmatpush1.msra.mxu0 0.0
        %1903 = vmatprep.subr.mxu0 0.0
        %1904 = vmatpush1.msra.mxu0 0.0
        %1905 = vmatprep.subr.mxu0 0.0
        %1906 = vmatpush1.msra.mxu0 0.0
        %1907 = vmatprep.subr.mxu0 0.0
        %1908 = vmatpush1.msra.mxu0 0.0
        %1909 = vmatprep.subr.mxu0 0.0
        %1910 = vmatpush1.msra.mxu0 0.0
        %1911 = vmatprep.subr.mxu0 0.0
        %1912 = vmatpush1.msra.mxu0 0.0
        %1913 = vmatprep.subr.mxu0 0.0
        %1914 = vmatpush1.msra.mxu0 0.0
        %1915 = vmatprep.subr.mxu0 0.0
        %1916 = vmatpush1.msra.mxu0 0.0
        %1917 = vmatprep.subr.mxu0 0.0
        %1918 = vmatpush1.msra.mxu0 0.0
        %1919 = vmatprep.subr.mxu0 0.0
        %1920 = vmatpush1.msra.mxu0 0.0
        %1921 = vmatprep.subr.mxu0 0.0
        %1922 = vmatpush1.msra.mxu0 0.0
        %1923 = vmatprep.subr.mxu0 0.0
        %1924 = vmatpush1.msra.mxu0 0.0
        %1925 = vmatprep.subr.mxu0 0.0
        %1926 = vmatpush1.msra.mxu0 0.0
        %1927 = vmatprep.subr.mxu0 0.0
        %1928 = vmatpush1.msra.mxu0 0.0
        %1929 = vmatprep.mubr.f32.mxu0 0.0
        %1930 = vmatmul.mubr.f32.gmra.mrb[0].mxu0 %v1860
        %v1931 = vpop.f32.mrb[0].mxu0
        %v1932 = vadd.f32 0.0, %v1931
        %v1933 = vpop.f32.mrb[0].mxu0
        %1934 = vmatprep.mubr.f32.mxu0 0.0
        %1935 = vmatmul.mubr.f32.gmra.mrb[0].mxu0 %v1863
        %v1936 = vpop.f32.mrb[0].mxu0
        %v1937 = vadd.f32 0.0, %v1936
        %v1938 = vpop.f32.mrb[0].mxu0
        %1939 = vdwg.mxu0
        %1942 = vrot.lane.b32.xlu0 %v732, 4
        %v1943 = vpop.permute.xlu0 %1942
        %1944 = vrot.lane.b32.xlu0 %v737, 4
        %v1945 = vpop.permute.xlu0 %1944
        %1950 = vrot.lane.b32.xlu0 %v932, 8
        %v1951 = vpop.permute.xlu0 %1950
        %1952 = vrot.lane.b32.xlu0 %v937, 8
        %v1953 = vpop.permute.xlu0 %1952
        %1958 = vrot.lane.b32.xlu0 %v1132, 12
        %v1959 = vpop.permute.xlu0 %1958
        %1960 = vrot.lane.b32.xlu0 %v1137, 12
        %v1961 = vpop.permute.xlu0 %1960
        %1966 = vrot.lane.b32.xlu0 %v1332, 16
        %v1967 = vpop.permute.xlu0 %1966
        %1968 = vrot.lane.b32.xlu0 %v1337, 16
        %v1969 = vpop.permute.xlu0 %1968
        %1974 = vrot.lane.b32.xlu0 %v1532, 20
        %v1975 = vpop.permute.xlu0 %1974
        %1976 = vrot.lane.b32.xlu0 %v1537, 20
        %v1977 = vpop.permute.xlu0 %1976
        %1982 = vrot.lane.b32.xlu0 %v1732, 24
        %v1983 = vpop.permute.xlu0 %1982
        %1984 = vrot.lane.b32.xlu0 %v1737, 24
        %v1985 = vpop.permute.xlu0 %1984
        %1990 = vrot.lane.b32.xlu0 %v1932, 28
        %v1991 = vpop.permute.xlu0 %1990
        %1992 = vrot.lane.b32.xlu0 %v1937, 28
        %v1993 = vpop.permute.xlu0 %1992
        %v1996 = vsel %vm346, %v532, %v1943
        %v1997 = vsel %vm346, %v537, %v1945
        %vm1998 = vcmask 64512
        %v1999 = vsel %vm1998, %v1996, %v1951
        %v2000 = vsel %vm1998, %v1997, %v1953
        %vm2001 = vcmask 97280
        %v2002 = vsel %vm2001, %v1999, %v1959
        %v2003 = vsel %vm2001, %v2000, %v1961
        %v2004 = vsel %vm430, %v2002, %v1967
        %v2005 = vsel %vm430, %v2003, %v1969
        %vm2006 = vcmask 162816
        %v2007 = vsel %vm2006, %v2004, %v1975
        %v2008 = vsel %vm2006, %v2005, %v1977
        %vm2009 = vcmask 195584
        %v2010 = vsel %vm2009, %v2007, %v1983
        %v2011 = vsel %vm2009, %v2008, %v1985
        %vm2012 = vcmask 228352
        %v2013 = vsel %vm2012, %v2010, %v1991
        %v2014 = vsel %vm2012, %v2011, %v1993
        %2015 = vst.msk [vmem:[#allocation3] sm:$0xff] %vm253, %v2013
        %2016 = vst.msk [vmem:[#allocation3 + $0x8] sm:$0xff] %vm253, %v2014
        %v2017 = vld [vmem:[#allocation3] sm:$0xff]
        %v2018 = vld [vmem:[#allocation3 + $0x8] sm:$0xff]
        %v2019 = vld [vmem:[#allocation9] sm:$0xff]
        %v2020 = vld [vmem:[#allocation9 + $0x8] sm:$0xff]
        %v2021 = vld [vmem:[#allocation9 + $0x10] sm:$0xff]
        %v2022 = vld [vmem:[#allocation9 + $0x18] sm:$0xff]
        %v2023 = vld [vmem:[%s3] sm:$0x1]
        %v2025 = vlaneseq
        %v2026 = vshrl.u32 %v2025, 7
        %v2027 = vsub.s32 0, %v2026
        %v2028 = vrot.slane %v2023, %v2027
        %v2031 = vsel %vm253, %v2017, 0
        %v2034 = vsel %vm253, %v2018, 0
        %2036 = vmatprep.subr.mxu0 0.0
        %2037 = vmatpush1.msra.mxu0 %v2019
        %2038 = vmatprep.subr.mxu0 0.0
        %2039 = vmatpush1.msra.mxu0 %v2020
        %2040 = vmatprep.subr.mxu0 0.0
        %2041 = vmatpush1.msra.mxu0 %v2021
        %2042 = vmatprep.subr.mxu0 0.0
        %2043 = vmatpush1.msra.mxu0 %v2022
        %2044 = vmatprep.subr.mxu0 0.0
        %2045 = vmatpush1.msra.mxu0 0.0
        %2046 = vmatprep.subr.mxu0 0.0
        %2047 = vmatpush1.msra.mxu0 0.0
        %2048 = vmatprep.subr.mxu0 0.0
        %2049 = vmatpush1.msra.mxu0 0.0
        %2050 = vmatprep.subr.mxu0 0.0
        %2051 = vmatpush1.msra.mxu0 0.0
        %2052 = vmatprep.subr.mxu0 0.0
        %2053 = vmatpush1.msra.mxu0 0.0
        %2054 = vmatprep.subr.mxu0 0.0
        %2055 = vmatpush1.msra.mxu0 0.0
        %2056 = vmatprep.subr.mxu0 0.0
        %2057 = vmatpush1.msra.mxu0 0.0
        %2058 = vmatprep.subr.mxu0 0.0
        %2059 = vmatpush1.msra.mxu0 0.0
        %2060 = vmatprep.subr.mxu0 0.0
        %2061 = vmatpush1.msra.mxu0 0.0
        %2062 = vmatprep.subr.mxu0 0.0
        %2063 = vmatpush1.msra.mxu0 0.0
        %2064 = vmatprep.subr.mxu0 0.0
        %2065 = vmatpush1.msra.mxu0 0.0
        %2066 = vmatprep.subr.mxu0 0.0
        %2067 = vmatpush1.msra.mxu0 0.0
        %2068 = vmatprep.subr.mxu0 0.0
        %2069 = vmatpush1.msra.mxu0 0.0
        %2070 = vmatprep.subr.mxu0 0.0
        %2071 = vmatpush1.msra.mxu0 0.0
        %2072 = vmatprep.subr.mxu0 0.0
        %2073 = vmatpush1.msra.mxu0 0.0
        %2074 = vmatprep.subr.mxu0 0.0
        %2075 = vmatpush1.msra.mxu0 0.0
        %2076 = vmatprep.subr.mxu0 0.0
        %2077 = vmatpush1.msra.mxu0 0.0
        %2078 = vmatprep.subr.mxu0 0.0
        %2079 = vmatpush1.msra.mxu0 0.0
        %2080 = vmatprep.subr.mxu0 0.0
        %2081 = vmatpush1.msra.mxu0 0.0
        %2082 = vmatprep.subr.mxu0 0.0
        %2083 = vmatpush1.msra.mxu0 0.0
        %2084 = vmatprep.subr.mxu0 0.0
        %2085 = vmatpush1.msra.mxu0 0.0
        %2086 = vmatprep.subr.mxu0 0.0
        %2087 = vmatpush1.msra.mxu0 0.0
        %2088 = vmatprep.subr.mxu0 0.0
        %2089 = vmatpush1.msra.mxu0 0.0
        %2090 = vmatprep.subr.mxu0 0.0
        %2091 = vmatpush1.msra.mxu0 0.0
        %2092 = vmatprep.subr.mxu0 0.0
        %2093 = vmatpush1.msra.mxu0 0.0
        %2094 = vmatprep.subr.mxu0 0.0
        %2095 = vmatpush1.msra.mxu0 0.0
        %2096 = vmatprep.subr.mxu0 0.0
        %2097 = vmatpush1.msra.mxu0 0.0
        %2098 = vmatprep.subr.mxu0 0.0
        %2099 = vmatpush1.msra.mxu0 0.0
        %2100 = vmatprep.mubr.f32.mxu0 0.0
        %2101 = vmatmul.mubr.f32.gmra.mrb[0].mxu0 %v2031
        %v2102 = vpop.f32.mrb[0].mxu0
        %v2103 = vadd.f32 %v2028, %v2102
        %v2104 = vpop.f32.mrb[0].mxu0
        %2105 = vmatprep.mubr.f32.mxu0 0.0
        %2106 = vmatmul.mubr.f32.gmra.mrb[0].mxu0 %v2034
        %v2107 = vpop.f32.mrb[0].mxu0
        %v2108 = vadd.f32 %v2028, %v2107
        %v2109 = vpop.f32.mrb[0].mxu0
        %2110 = vdwg.mxu0
        %2111 = vst.msk [vmem:[%s244] sm:$0xff] %vm253, %v2103
        %2112 = vst.msk [vmem:[%s244 + $0x8] sm:$0xff] %vm253, %v2108
        %s2113 = sand.u32 %s119, 1
        %s2114 = scalar_lea.sflag [#allocation6], %s2113
        %s2115 = sand.u32 %s119, 1
        %s2116 = smul.addr %s2115, 16
        %s2117 = scalar_lea.vmem [#allocation10], %s2116
        // Predicated region
        $region49: #{tpu_custom_call.1} parent=35 // pred_check
          %p2118 = pneg %p129
        $region50: #{tpu_custom_call.1} parent=35 // pred_check_branch
          %2120 = sbr.rel (%p2118) target = $region52
        $region51: #{tpu_custom_call.1} parent=35 // pred_region
          %s2121 = smul.u32 2, %s22
          %s2123 = ssub.s32 256, 256
          %2124 = vsyncadd %s2114, %s2123
          %s2125 = smul.addr %s2121, 128
          %s2126 = scalar_lea.hbm %s4, %s2125
          %s2127 = sshll.u32 %s2117, 4
          %s2128 = int_to_ptr.vmem [resolvable:$true] %s2127
          %2133 = dma.vmem_to_hbm [thread:$0]  %s2128, 256, %s2126, %s2114, 128, 128, 8
        $region52: #{tpu_custom_call.1} parent=35 // pred_fallthru
          _
      $region36: #{tpu_custom_call.1} parent=5 // pred_fallthru
        _
      %p2134 = scmp.le.s32.totalorder 2, %s17
      // Predicated region
      $region53: #{tpu_custom_call.1} parent=5 // pred_check
        %p2135 = pneg %p2134
      $region54: #{tpu_custom_call.1} parent=5 // pred_check_branch
        %2137 = sbr.rel (%p2135) target = $region56
      $region55: #{tpu_custom_call.1} parent=5 // pred_region
        %s2138 = ssub.s32 %s17, 2
        // Predicated region
        $region57: #{tpu_custom_call.1} parent=55 // pred_check
          %p2139 = pneg %p135
        $region58: #{tpu_custom_call.1} parent=55 // pred_check_branch
          %2141 = sbr.rel (%p2139) target = $region60
        $region59: #{tpu_custom_call.1} parent=55 // pred_region
          %s2142 = sand.u32 %s120, 1
          %s2143 = scalar_lea.sflag [#allocation6], %s2142
          %s2144 = sand.u32 %s120, 1
          %s2145 = smul.addr %s2144, 16
          %s2146 = scalar_lea.vmem [#allocation10], %s2145
          %2147 = dma.done %s2143, 256
        $region60: #{tpu_custom_call.1} parent=55 // pred_fallthru
          _
      $region56: #{tpu_custom_call.1} parent=5 // pred_fallthru
        _
    $region6: #{tpu_custom_call.1} parent=1 // loop_footer
      %s21 = sadd.s32 1, %s17
    $region7: #{tpu_custom_call.1} parent=1 // loop_footer_branch
      %16 = sbr.rel target = $region3
    $region8: #{tpu_custom_call.1} parent=1 // loop_exit
      _
    %2148 = vsyncpa [#allocation5], 1
    %s2149 = scalar_lea.sflag [#allocation5], 1
    %2150 = vsyncpa %s2149, 1
    %2151 = vsyncpa [#allocation8], 1
    %2152 = vsyncpa [#allocation6], 1
    %s2153 = scalar_lea.sflag [#allocation6], 1
    %2154 = vsyncpa %s2153, 1

</llo_original>
